<compile_context>
chip_gen: v7x
topology: tpu7x:2x2x1
jax: 0.10.0
libtpu: 0.0.40
codegen_flags: <defaults>
</compile_context>

<pallas_src>
import jax
import jax.numpy as jnp
from jax import lax
from jax.experimental import pallas as pl
from jax.experimental.pallas import tpu as pltpu


def _sigmoid(x):
    # sigmoid(x) == 0.5 * tanh(0.5 * x) + 0.5  (one EUP op + cheap VPU mul/add)
    return 0.5 * jnp.tanh(0.5 * x) + 0.5


def _mlp_kernel(xn0_ref, feat_ref,
                winx_ref, winf_ref, bin_ref,
                w1_ref, b1_ref, w2_ref, b2_ref,
                wout_ref, bout_ref,
                out_ref):
    """Whole prediction horizon for one M tile (M = B*N lives in the lane axis).

      xn0_ref : (1, TM)     initial rain value for this M tile
      feat_ref: (P, F, TM)  exogenous features, all P steps for this M tile
      weights : (out_features, in_features) orientation  ->  y = W @ x
      bout_ref: (1,)        fc_out bias, SMEM scalar
      out_ref : (P, 1, TM)  predictions, all P steps for this M tile
    """
    P, _, TM = out_ref.shape
    H = w1_ref.shape[0]

    # Loop-invariant reads + hoisted (H,1)->(H,TM) broadcasts (JAX does not
    # CSE broadcast_in_dim, so do them once, not P times).
    winx = winx_ref[...]                                   # (H, 1)
    winf = winf_ref[...]                                   # (H, F)
    w1 = w1_ref[...]                                       # (H, H)
    w2 = w2_ref[...]                                       # (H, H)
    wout = wout_ref[...]                                   # (H, 1)
    bin_b = jnp.broadcast_to(bin_ref[...], (H, TM))
    b1_b = jnp.broadcast_to(b1_ref[...], (H, TM))
    b2_b = jnp.broadcast_to(b2_ref[...], (H, TM))
    bout = bout_ref[0]                                     # SMEM scalar

    def step(p, xn):
        feat = feat_ref[p]                                 # (F, TM)
        # fc_in on cat([xn, feat]) = W_in^T @ [xn; feat] + b_in
        #   xn part  : K=1 contraction -> VPU outer product (no MXU push)
        #   feat part: one well-shaped (H,F)@(F,TM) MXU matmul
        a = (winx * xn
             + jnp.dot(winf, feat, preferred_element_type=jnp.float32)
             + bin_b)                                      # (H, TM)
        # mlp: Linear -> Sigmoid -> Linear -> Sigmoid
        h = _sigmoid(jnp.dot(w1, a, preferred_element_type=jnp.float32) + b1_b)
        h = _sigmoid(jnp.dot(w2, h, preferred_element_type=jnp.float32) + b2_b)
        # fc_out: N=1 contraction -> VPU multiply + sublane reduction
        xn_new = jnp.sum(wout * h, axis=0, keepdims=True) + bout
        out_ref[p] = xn_new                                # lane-dense (1, TM) store
        return xn_new

    # Recurrent carry lives in vregs; the full horizon runs inside one grid
    # step so grid / DMA fixed costs are paid once per M tile.
    unroll = True if P <= 32 else 8
    lax.fori_loop(0, P, step, xn0_ref[...], unroll=unroll)


class MLPPallas:
    """JAX/Pallas re-implementation of the PyTorch MLP module."""

    def __init__(self, hist_len, pred_len, in_dim, key):
        self.hist_len = hist_len
        self.pred_len = pred_len
        self.in_dim = in_dim
        self.hid_dim = 16
        self.out_dim = 1

        ks = jax.random.split(key, 8)
        scale = 0.1

        def w(k, shape):
            return (scale * jax.random.normal(k, shape)).astype(jnp.float32)

        # weights stored as (in_features, out_features), like torch Linear^T
        self.w_in = w(ks[0], (in_dim, self.hid_dim))
        self.b_in = w(ks[1], (1, self.hid_dim))
        self.w1 = w(ks[2], (self.hid_dim, self.hid_dim))
        self.b1 = w(ks[3], (1, self.hid_dim))
        self.w2 = w(ks[4], (self.hid_dim, self.hid_dim))
        self.b2 = w(ks[5], (1, self.hid_dim))
        self.w_out = w(ks[6], (self.hid_dim, self.out_dim))
        self.b_out = w(ks[7], (1, self.out_dim))

    def __call__(self, rain_hist, feature):
        # rain_hist: (B, hist_len, N, 1)
        # feature:   (B, hist_len + pred_len, N, in_dim - 1)
        B, _, N, _ = rain_hist.shape
        H = self.hid_dim
        F = self.in_dim - 1
        P = self.pred_len
        M = B * N

        # Lane-dense M tiling: pad M up to a multiple of 128, pick the widest
        # lane tile (<= 4096, multiple of 128) that divides it.  For large M,
        # keep >= 2 m-tiles so the "parallel" axis can shard across both v7x
        # TensorCores (no-op on v5e/v6e).
        M_pad = ((M + 127) // 128) * 128

        def pick_tm(m_pad):
            cap = min(4096, m_pad)
            cands = [t for t in range(cap, 0, -128) if m_pad % t == 0]
            if m_pad >= 2048:
                for t in cands:
                    if m_pad // t >= 2:
                        return t
            return cands[0]

        TM = pick_tm(M_pad)
        num_m = M_pad // TM

        # Transposed, lane-dense operands (M in the lane axis).
        xn0 = rain_hist[:, -1, :, 0].reshape(1, M).astype(jnp.float32)
        xn0 = jnp.pad(xn0, ((0, 0), (0, M_pad - M)))

        feat = feature[:, self.hist_len:self.hist_len + P]            # (B, P, N, F)
        feat = jnp.transpose(feat, (1, 3, 0, 2)).reshape(P, F, M)      # (P, F, M)
        feat = jnp.pad(feat, ((0, 0), (0, 0), (0, M_pad - M))).astype(jnp.float32)
        # TODO(synk): this pred-window transpose is one extra HBM round trip of
        # the only large input; if features are reused across calls (or can be
        # produced pre-transposed / cast to bf16 upstream) hoist it out.

        # Weights in "W @ x" orientation.
        winx = self.w_in[:1].T            # (H, 1)  multiplies xn
        winf = self.w_in[1:].T            # (H, F)  multiplies feature
        bin_ = self.b_in.T                # (H, 1)
        w1t, b1 = self.w1.T, self.b1.T    # (H, H), (H, 1)
        w2t, b2 = self.w2.T, self.b2.T
        wout = self.w_out                 # (H, 1)
        bout = self.b_out.reshape(1)      # (1,)  -> SMEM scalar

        def full(shape):
            return pl.BlockSpec(shape, lambda m: (0,) * len(shape))

        grid_spec = pltpu.PrefetchScalarGridSpec(
            num_scalar_prefetch=0,
            grid=(num_m,),
            in_specs=[
                pl.BlockSpec((1, TM), lambda m: (0, m)),        # xn0
                pl.BlockSpec((P, F, TM), lambda m: (0, 0, m)),  # feat (all P steps)
                full((H, 1)),              # winx
                full((H, F)),              # winf
                full((H, 1)),              # b_in
                full((H, H)),              # w1^T
                full((H, 1)),              # b1
                full((H, H)),              # w2^T
                full((H, 1)),              # b2
                full((H, 1)),              # w_out
                pl.BlockSpec(memory_space=pltpu.MemorySpace.SMEM),  # b_out scalar
            ],
            out_specs=pl.BlockSpec((P, 1, TM), lambda m: (0, 0, m)),
        )

        # Tight VMEM budget: double-buffered feat/out tiles + temps + weights,
        # with 2x margin; clamped to stay within v7x's 64 MiB physical VMEM.
        F_pad = ((F + 7) // 8) * 8
        vmem_need = 4 * TM * (2 * P * F_pad      # feat, double-buffered
                              + 2 * P * 8        # out, double-buffered (1->8 sublanes)
                              + 2 * 8            # xn0
                              + 8 * H + 64)      # bias broadcasts + a/h temps + slack
        vmem_limit = int(min(64 * 2**20, max(8 * 2**20, 2 * vmem_need)))

        out = pl.pallas_call(
            _mlp_kernel,
            out_shape=jax.ShapeDtypeStruct((P, 1, M_pad), jnp.float32),
            grid_spec=grid_spec,
            compiler_params=pltpu.CompilerParams(
                dimension_semantics=("parallel",),
                vmem_limit_bytes=vmem_limit,
            ),
        )(xn0, feat, winx, winf, bin_, w1t, b1, w2t, b2, wout, bout)

        # (P, 1, M_pad) -> (B, P, N, 1)
        out = out[:, 0, :M].reshape(P, B, N, 1)
        return jnp.transpose(out, (1, 0, 2, 3))

    def reference(self, rain_hist, feature):
        """Pure-JAX reference mirroring the PyTorch forward."""
        xn = rain_hist[:, -1].astype(jnp.float32)            # (B, N, 1)
        preds = []
        for i in range(self.pred_len):
            x = jnp.concatenate(
                [xn, feature[:, self.hist_len + i].astype(jnp.float32)], axis=-1)
            x = x @ self.w_in + self.b_in[0]
            x = jax.nn.sigmoid(x @ self.w1 + self.b1[0])
            x = jax.nn.sigmoid(x @ self.w2 + self.b2[0])
            xn = x @ self.w_out + self.b_out[0]
            preds.append(xn)
        return jnp.stack(preds, axis=1)


if __name__ == "__main__":
    B, N = 2, 8
    hist_len, pred_len, in_dim = 5, 4, 8

    key = jax.random.PRNGKey(0)
    k_model, k_rain, k_feat = jax.random.split(key, 3)

    model = MLPPallas(hist_len, pred_len, in_dim, k_model)

    rain_hist = jax.random.normal(k_rain, (B, hist_len, N, 1), dtype=jnp.float32)
    feature = jax.random.normal(
        k_feat, (B, hist_len + pred_len, N, in_dim - 1), dtype=jnp.float32)

    out = model(rain_hist, feature)
    out = jax.block_until_ready(out)

    ref = model.reference(rain_hist, feature)
    assert out.shape == (B, pred_len, N, 1), out.shape
    assert jnp.allclose(out, ref, atol=1e-5, rtol=1e-5), float(jnp.abs(out - ref).max())

    print("KERNEL_OK")
</pallas_src>

<mosaic_0001>
module attributes {stable_mosaic.version = 11 : i64} {
  func.func @_mlp_kernel(%arg0: i32, %arg1: memref<1x128xf32, #tpu.memory_space<vmem>>, %arg2: memref<4x7x128xf32, #tpu.memory_space<vmem>>, %arg3: memref<16x1xf32, #tpu.memory_space<vmem>>, %arg4: memref<16x7xf32, #tpu.memory_space<vmem>>, %arg5: memref<16x1xf32, #tpu.memory_space<vmem>>, %arg6: memref<16x16xf32, #tpu.memory_space<vmem>>, %arg7: memref<16x1xf32, #tpu.memory_space<vmem>>, %arg8: memref<16x16xf32, #tpu.memory_space<vmem>>, %arg9: memref<16x1xf32, #tpu.memory_space<vmem>>, %arg10: memref<16x1xf32, #tpu.memory_space<vmem>>, %arg11: memref<1xf32, #tpu.memory_space<smem>>, %arg12: memref<4x1x128xf32, #tpu.memory_space<vmem>>) attributes {dimension_semantics = [#tpu.dimension_semantics<parallel>], iteration_bounds = array<i64: 1>, scalar_prefetch = 0 : i64, scratch_operands = 0 : i64, tpu.core_type = #tpu.core_type<tc>, window_params = [{transform_indices = @transform_0, window_bounds = array<i64: 1, 128>}, {transform_indices = @transform_1, window_bounds = array<i64: 4, 7, 128>}, {pipeline_mode = #tpu.pipeline_mode<synchronous>, transform_indices = @transform_2, window_bounds = array<i64: 16, 1>}, {pipeline_mode = #tpu.pipeline_mode<synchronous>, transform_indices = @transform_3, window_bounds = array<i64: 16, 7>}, {pipeline_mode = #tpu.pipeline_mode<synchronous>, transform_indices = @transform_4, window_bounds = array<i64: 16, 1>}, {pipeline_mode = #tpu.pipeline_mode<synchronous>, transform_indices = @transform_5, window_bounds = array<i64: 16, 16>}, {pipeline_mode = #tpu.pipeline_mode<synchronous>, transform_indices = @transform_6, window_bounds = array<i64: 16, 1>}, {pipeline_mode = #tpu.pipeline_mode<synchronous>, transform_indices = @transform_7, window_bounds = array<i64: 16, 16>}, {pipeline_mode = #tpu.pipeline_mode<synchronous>, transform_indices = @transform_8, window_bounds = array<i64: 16, 1>}, {pipeline_mode = #tpu.pipeline_mode<synchronous>, transform_indices = @transform_9, window_bounds = array<i64: 16, 1>}, {transform_indices = @transform_10, window_bounds = array<i64: 1>}, {transform_indices = @transform_11, window_bounds = array<i64: 4, 1, 128>}]} {
    %c0 = arith.constant 0 : index
    %c0_0 = arith.constant 0 : index
    %0 = vector.load %arg3[%c0, %c0_0] : memref<16x1xf32, #tpu.memory_space<vmem>>, vector<16x1xf32>
    %c0_1 = arith.constant 0 : index
    %c0_2 = arith.constant 0 : index
    %1 = vector.load %arg4[%c0_1, %c0_2] : memref<16x7xf32, #tpu.memory_space<vmem>>, vector<16x7xf32>
    %c0_3 = arith.constant 0 : index
    %c0_4 = arith.constant 0 : index
    %2 = vector.load %arg6[%c0_3, %c0_4] : memref<16x16xf32, #tpu.memory_space<vmem>>, vector<16x16xf32>
    %c0_5 = arith.constant 0 : index
    %c0_6 = arith.constant 0 : index
    %3 = vector.load %arg8[%c0_5, %c0_6] : memref<16x16xf32, #tpu.memory_space<vmem>>, vector<16x16xf32>
    %c0_7 = arith.constant 0 : index
    %c0_8 = arith.constant 0 : index
    %4 = vector.load %arg10[%c0_7, %c0_8] : memref<16x1xf32, #tpu.memory_space<vmem>>, vector<16x1xf32>
    %c0_9 = arith.constant 0 : index
    %c0_10 = arith.constant 0 : index
    %5 = vector.load %arg5[%c0_9, %c0_10] : memref<16x1xf32, #tpu.memory_space<vmem>>, vector<16x1xf32>
    %6 = vector.shape_cast %5 : vector<16x1xf32> to vector<16x1xf32>
    %7 = vector.broadcast %6 : vector<16x1xf32> to vector<16x128xf32>
    %c0_11 = arith.constant 0 : index
    %c0_12 = arith.constant 0 : index
    %8 = vector.load %arg7[%c0_11, %c0_12] : memref<16x1xf32, #tpu.memory_space<vmem>>, vector<16x1xf32>
    %9 = vector.shape_cast %8 : vector<16x1xf32> to vector<16x1xf32>
    %10 = vector.broadcast %9 : vector<16x1xf32> to vector<16x128xf32>
    %c0_13 = arith.constant 0 : index
    %c0_14 = arith.constant 0 : index
    %11 = vector.load %arg9[%c0_13, %c0_14] : memref<16x1xf32, #tpu.memory_space<vmem>>, vector<16x1xf32>
    %12 = vector.shape_cast %11 : vector<16x1xf32> to vector<16x1xf32>
    %13 = vector.broadcast %12 : vector<16x1xf32> to vector<16x128xf32>
    %c0_15 = arith.constant 0 : index
    %14 = memref.load %arg11[%c0_15] : memref<1xf32, #tpu.memory_space<smem>>
    %c0_16 = arith.constant 0 : index
    %c0_17 = arith.constant 0 : index
    %15 = vector.load %arg1[%c0_16, %c0_17] : memref<1x128xf32, #tpu.memory_space<vmem>>, vector<1x128xf32>
    %c0_i32 = arith.constant 0 : i32
    %16 = arith.index_cast %c0_i32 : i32 to index
    %c0_18 = arith.constant 0 : index
    %c0_19 = arith.constant 0 : index
    %17 = vector.load %arg2[%16, %c0_18, %c0_19] : memref<4x7x128xf32, #tpu.memory_space<vmem>>, vector<1x7x128xf32>
    %18 = vector.shape_cast %17 : vector<1x7x128xf32> to vector<7x128xf32>
    %19 = vector.broadcast %0 : vector<16x1xf32> to vector<16x128xf32>
    %20 = vector.broadcast %15 : vector<1x128xf32> to vector<16x128xf32>
    %21 = arith.mulf %19, %20 : vector<16x128xf32>
    %cst = arith.constant dense<0.000000e+00> : vector<16x128xf32>
    %22 = tpu.matmul %1, %18, %cst {dimension_numbers = #tpu.dot_dimension_numbers<[1], [0], [0], [1], [0, 0, 1, 1], [], []>} : vector<16x7xf32>, vector<7x128xf32>, vector<16x128xf32> -> vector<16x128xf32>
    %23 = arith.addf %21, %22 : vector<16x128xf32>
    %24 = arith.addf %23, %7 : vector<16x128xf32>
    %cst_20 = arith.constant dense<0.000000e+00> : vector<16x128xf32>
    %25 = tpu.matmul %2, %24, %cst_20 {dimension_numbers = #tpu.dot_dimension_numbers<[1], [0], [0], [1], [0, 0, 1, 1], [], []>} : vector<16x16xf32>, vector<16x128xf32>, vector<16x128xf32> -> vector<16x128xf32>
    %26 = arith.addf %25, %10 : vector<16x128xf32>
    %cst_21 = arith.constant 5.000000e-01 : f32
    %27 = vector.broadcast %cst_21 : f32 to vector<16x128xf32>
    %28 = arith.mulf %27, %26 : vector<16x128xf32>
    %29 = math.tanh %28 : vector<16x128xf32>
    %cst_22 = arith.constant 5.000000e-01 : f32
    %30 = vector.broadcast %cst_22 : f32 to vector<16x128xf32>
    %31 = arith.mulf %30, %29 : vector<16x128xf32>
    %cst_23 = arith.constant 5.000000e-01 : f32
    %32 = vector.broadcast %cst_23 : f32 to vector<16x128xf32>
    %33 = arith.addf %31, %32 : vector<16x128xf32>
    %cst_24 = arith.constant dense<0.000000e+00> : vector<16x128xf32>
    %34 = tpu.matmul %3, %33, %cst_24 {dimension_numbers = #tpu.dot_dimension_numbers<[1], [0], [0], [1], [0, 0, 1, 1], [], []>} : vector<16x16xf32>, vector<16x128xf32>, vector<16x128xf32> -> vector<16x128xf32>
    %35 = arith.addf %34, %13 : vector<16x128xf32>
    %cst_25 = arith.constant 5.000000e-01 : f32
    %36 = vector.broadcast %cst_25 : f32 to vector<16x128xf32>
    %37 = arith.mulf %36, %35 : vector<16x128xf32>
    %38 = math.tanh %37 : vector<16x128xf32>
    %cst_26 = arith.constant 5.000000e-01 : f32
    %39 = vector.broadcast %cst_26 : f32 to vector<16x128xf32>
    %40 = arith.mulf %39, %38 : vector<16x128xf32>
    %cst_27 = arith.constant 5.000000e-01 : f32
    %41 = vector.broadcast %cst_27 : f32 to vector<16x128xf32>
    %42 = arith.addf %40, %41 : vector<16x128xf32>
    %43 = vector.broadcast %4 : vector<16x1xf32> to vector<16x128xf32>
    %44 = arith.mulf %43, %42 : vector<16x128xf32>
    %cst_28 = arith.constant dense<0.000000e+00> : vector<128xf32>
    %45 = vector.multi_reduction <add>, %44, %cst_28 [0] : vector<16x128xf32> to vector<128xf32>
    %46 = vector.shape_cast %45 : vector<128xf32> to vector<1x128xf32>
    %47 = vector.broadcast %14 : f32 to vector<1x128xf32>
    %48 = arith.addf %46, %47 : vector<1x128xf32>
    %49 = arith.index_cast %c0_i32 : i32 to index
    %c0_29 = arith.constant 0 : index
    %c0_30 = arith.constant 0 : index
    %50 = vector.load %arg12[%49, %c0_29, %c0_30] : memref<4x1x128xf32, #tpu.memory_space<vmem>>, vector<1x1x128xf32>
    %51 = vector.shape_cast %50 : vector<1x1x128xf32> to vector<1x128xf32>
    %52 = vector.shape_cast %48 : vector<1x128xf32> to vector<1x1x128xf32>
    tpu.vector_store %arg12[%49, %c0_29, %c0_30], %52 {strides = array<i32>} : memref<4x1x128xf32, #tpu.memory_space<vmem>>, vector<1x1x128xf32>,
    %c1_i32 = arith.constant 1 : i32
    %53 = arith.index_cast %c1_i32 : i32 to index
    %c0_31 = arith.constant 0 : index
    %c0_32 = arith.constant 0 : index
    %54 = vector.load %arg2[%53, %c0_31, %c0_32] : memref<4x7x128xf32, #tpu.memory_space<vmem>>, vector<1x7x128xf32>
    %55 = vector.shape_cast %54 : vector<1x7x128xf32> to vector<7x128xf32>
    %56 = vector.broadcast %0 : vector<16x1xf32> to vector<16x128xf32>
    %57 = vector.broadcast %48 : vector<1x128xf32> to vector<16x128xf32>
    %58 = arith.mulf %56, %57 : vector<16x128xf32>
    %cst_33 = arith.constant dense<0.000000e+00> : vector<16x128xf32>
    %59 = tpu.matmul %1, %55, %cst_33 {dimension_numbers = #tpu.dot_dimension_numbers<[1], [0], [0], [1], [0, 0, 1, 1], [], []>} : vector<16x7xf32>, vector<7x128xf32>, vector<16x128xf32> -> vector<16x128xf32>
    %60 = arith.addf %58, %59 : vector<16x128xf32>
    %61 = arith.addf %60, %7 : vector<16x128xf32>
    %cst_34 = arith.constant dense<0.000000e+00> : vector<16x128xf32>
    %62 = tpu.matmul %2, %61, %cst_34 {dimension_numbers = #tpu.dot_dimension_numbers<[1], [0], [0], [1], [0, 0, 1, 1], [], []>} : vector<16x16xf32>, vector<16x128xf32>, vector<16x128xf32> -> vector<16x128xf32>
    %63 = arith.addf %62, %10 : vector<16x128xf32>
    %cst_35 = arith.constant 5.000000e-01 : f32
    %64 = vector.broadcast %cst_35 : f32 to vector<16x128xf32>
    %65 = arith.mulf %64, %63 : vector<16x128xf32>
    %66 = math.tanh %65 : vector<16x128xf32>
    %cst_36 = arith.constant 5.000000e-01 : f32
    %67 = vector.broadcast %cst_36 : f32 to vector<16x128xf32>
    %68 = arith.mulf %67, %66 : vector<16x128xf32>
    %cst_37 = arith.constant 5.000000e-01 : f32
    %69 = vector.broadcast %cst_37 : f32 to vector<16x128xf32>
    %70 = arith.addf %68, %69 : vector<16x128xf32>
    %cst_38 = arith.constant dense<0.000000e+00> : vector<16x128xf32>
    %71 = tpu.matmul %3, %70, %cst_38 {dimension_numbers = #tpu.dot_dimension_numbers<[1], [0], [0], [1], [0, 0, 1, 1], [], []>} : vector<16x16xf32>, vector<16x128xf32>, vector<16x128xf32> -> vector<16x128xf32>
    %72 = arith.addf %71, %13 : vector<16x128xf32>
    %cst_39 = arith.constant 5.000000e-01 : f32
    %73 = vector.broadcast %cst_39 : f32 to vector<16x128xf32>
    %74 = arith.mulf %73, %72 : vector<16x128xf32>
    %75 = math.tanh %74 : vector<16x128xf32>
    %cst_40 = arith.constant 5.000000e-01 : f32
    %76 = vector.broadcast %cst_40 : f32 to vector<16x128xf32>
    %77 = arith.mulf %76, %75 : vector<16x128xf32>
    %cst_41 = arith.constant 5.000000e-01 : f32
    %78 = vector.broadcast %cst_41 : f32 to vector<16x128xf32>
    %79 = arith.addf %77, %78 : vector<16x128xf32>
    %80 = vector.broadcast %4 : vector<16x1xf32> to vector<16x128xf32>
    %81 = arith.mulf %80, %79 : vector<16x128xf32>
    %cst_42 = arith.constant dense<0.000000e+00> : vector<128xf32>
    %82 = vector.multi_reduction <add>, %81, %cst_42 [0] : vector<16x128xf32> to vector<128xf32>
    %83 = vector.shape_cast %82 : vector<128xf32> to vector<1x128xf32>
    %84 = vector.broadcast %14 : f32 to vector<1x128xf32>
    %85 = arith.addf %83, %84 : vector<1x128xf32>
    %86 = arith.index_cast %c1_i32 : i32 to index
    %c0_43 = arith.constant 0 : index
    %c0_44 = arith.constant 0 : index
    %87 = vector.load %arg12[%86, %c0_43, %c0_44] : memref<4x1x128xf32, #tpu.memory_space<vmem>>, vector<1x1x128xf32>
    %88 = vector.shape_cast %87 : vector<1x1x128xf32> to vector<1x128xf32>
    %89 = vector.shape_cast %85 : vector<1x128xf32> to vector<1x1x128xf32>
    tpu.vector_store %arg12[%86, %c0_43, %c0_44], %89 {strides = array<i32>} : memref<4x1x128xf32, #tpu.memory_space<vmem>>, vector<1x1x128xf32>,
    %c2_i32 = arith.constant 2 : i32
    %90 = arith.index_cast %c2_i32 : i32 to index
    %c0_45 = arith.constant 0 : index
    %c0_46 = arith.constant 0 : index
    %91 = vector.load %arg2[%90, %c0_45, %c0_46] : memref<4x7x128xf32, #tpu.memory_space<vmem>>, vector<1x7x128xf32>
    %92 = vector.shape_cast %91 : vector<1x7x128xf32> to vector<7x128xf32>
    %93 = vector.broadcast %0 : vector<16x1xf32> to vector<16x128xf32>
    %94 = vector.broadcast %85 : vector<1x128xf32> to vector<16x128xf32>
    %95 = arith.mulf %93, %94 : vector<16x128xf32>
    %cst_47 = arith.constant dense<0.000000e+00> : vector<16x128xf32>
    %96 = tpu.matmul %1, %92, %cst_47 {dimension_numbers = #tpu.dot_dimension_numbers<[1], [0], [0], [1], [0, 0, 1, 1], [], []>} : vector<16x7xf32>, vector<7x128xf32>, vector<16x128xf32> -> vector<16x128xf32>
    %97 = arith.addf %95, %96 : vector<16x128xf32>
    %98 = arith.addf %97, %7 : vector<16x128xf32>
    %cst_48 = arith.constant dense<0.000000e+00> : vector<16x128xf32>
    %99 = tpu.matmul %2, %98, %cst_48 {dimension_numbers = #tpu.dot_dimension_numbers<[1], [0], [0], [1], [0, 0, 1, 1], [], []>} : vector<16x16xf32>, vector<16x128xf32>, vector<16x128xf32> -> vector<16x128xf32>
    %100 = arith.addf %99, %10 : vector<16x128xf32>
    %cst_49 = arith.constant 5.000000e-01 : f32
    %101 = vector.broadcast %cst_49 : f32 to vector<16x128xf32>
    %102 = arith.mulf %101, %100 : vector<16x128xf32>
    %103 = math.tanh %102 : vector<16x128xf32>
    %cst_50 = arith.constant 5.000000e-01 : f32
    %104 = vector.broadcast %cst_50 : f32 to vector<16x128xf32>
    %105 = arith.mulf %104, %103 : vector<16x128xf32>
    %cst_51 = arith.constant 5.000000e-01 : f32
    %106 = vector.broadcast %cst_51 : f32 to vector<16x128xf32>
    %107 = arith.addf %105, %106 : vector<16x128xf32>
    %cst_52 = arith.constant dense<0.000000e+00> : vector<16x128xf32>
    %108 = tpu.matmul %3, %107, %cst_52 {dimension_numbers = #tpu.dot_dimension_numbers<[1], [0], [0], [1], [0, 0, 1, 1], [], []>} : vector<16x16xf32>, vector<16x128xf32>, vector<16x128xf32> -> vector<16x128xf32>
    %109 = arith.addf %108, %13 : vector<16x128xf32>
    %cst_53 = arith.constant 5.000000e-01 : f32
    %110 = vector.broadcast %cst_53 : f32 to vector<16x128xf32>
    %111 = arith.mulf %110, %109 : vector<16x128xf32>
    %112 = math.tanh %111 : vector<16x128xf32>
    %cst_54 = arith.constant 5.000000e-01 : f32
    %113 = vector.broadcast %cst_54 : f32 to vector<16x128xf32>
    %114 = arith.mulf %113, %112 : vector<16x128xf32>
    %cst_55 = arith.constant 5.000000e-01 : f32
    %115 = vector.broadcast %cst_55 : f32 to vector<16x128xf32>
    %116 = arith.addf %114, %115 : vector<16x128xf32>
    %117 = vector.broadcast %4 : vector<16x1xf32> to vector<16x128xf32>
    %118 = arith.mulf %117, %116 : vector<16x128xf32>
    %cst_56 = arith.constant dense<0.000000e+00> : vector<128xf32>
    %119 = vector.multi_reduction <add>, %118, %cst_56 [0] : vector<16x128xf32> to vector<128xf32>
    %120 = vector.shape_cast %119 : vector<128xf32> to vector<1x128xf32>
    %121 = vector.broadcast %14 : f32 to vector<1x128xf32>
    %122 = arith.addf %120, %121 : vector<1x128xf32>
    %123 = arith.index_cast %c2_i32 : i32 to index
    %c0_57 = arith.constant 0 : index
    %c0_58 = arith.constant 0 : index
    %124 = vector.load %arg12[%123, %c0_57, %c0_58] : memref<4x1x128xf32, #tpu.memory_space<vmem>>, vector<1x1x128xf32>
    %125 = vector.shape_cast %124 : vector<1x1x128xf32> to vector<1x128xf32>
    %126 = vector.shape_cast %122 : vector<1x128xf32> to vector<1x1x128xf32>
    tpu.vector_store %arg12[%123, %c0_57, %c0_58], %126 {strides = array<i32>} : memref<4x1x128xf32, #tpu.memory_space<vmem>>, vector<1x1x128xf32>,
    %c3_i32 = arith.constant 3 : i32
    %127 = arith.index_cast %c3_i32 : i32 to index
    %c0_59 = arith.constant 0 : index
    %c0_60 = arith.constant 0 : index
    %128 = vector.load %arg2[%127, %c0_59, %c0_60] : memref<4x7x128xf32, #tpu.memory_space<vmem>>, vector<1x7x128xf32>
    %129 = vector.shape_cast %128 : vector<1x7x128xf32> to vector<7x128xf32>
    %130 = vector.broadcast %0 : vector<16x1xf32> to vector<16x128xf32>
    %131 = vector.broadcast %122 : vector<1x128xf32> to vector<16x128xf32>
    %132 = arith.mulf %130, %131 : vector<16x128xf32>
    %cst_61 = arith.constant dense<0.000000e+00> : vector<16x128xf32>
    %133 = tpu.matmul %1, %129, %cst_61 {dimension_numbers = #tpu.dot_dimension_numbers<[1], [0], [0], [1], [0, 0, 1, 1], [], []>} : vector<16x7xf32>, vector<7x128xf32>, vector<16x128xf32> -> vector<16x128xf32>
    %134 = arith.addf %132, %133 : vector<16x128xf32>
    %135 = arith.addf %134, %7 : vector<16x128xf32>
    %cst_62 = arith.constant dense<0.000000e+00> : vector<16x128xf32>
    %136 = tpu.matmul %2, %135, %cst_62 {dimension_numbers = #tpu.dot_dimension_numbers<[1], [0], [0], [1], [0, 0, 1, 1], [], []>} : vector<16x16xf32>, vector<16x128xf32>, vector<16x128xf32> -> vector<16x128xf32>
    %137 = arith.addf %136, %10 : vector<16x128xf32>
    %cst_63 = arith.constant 5.000000e-01 : f32
    %138 = vector.broadcast %cst_63 : f32 to vector<16x128xf32>
    %139 = arith.mulf %138, %137 : vector<16x128xf32>
    %140 = math.tanh %139 : vector<16x128xf32>
    %cst_64 = arith.constant 5.000000e-01 : f32
    %141 = vector.broadcast %cst_64 : f32 to vector<16x128xf32>
    %142 = arith.mulf %141, %140 : vector<16x128xf32>
    %cst_65 = arith.constant 5.000000e-01 : f32
    %143 = vector.broadcast %cst_65 : f32 to vector<16x128xf32>
    %144 = arith.addf %142, %143 : vector<16x128xf32>
    %cst_66 = arith.constant dense<0.000000e+00> : vector<16x128xf32>
    %145 = tpu.matmul %3, %144, %cst_66 {dimension_numbers = #tpu.dot_dimension_numbers<[1], [0], [0], [1], [0, 0, 1, 1], [], []>} : vector<16x16xf32>, vector<16x128xf32>, vector<16x128xf32> -> vector<16x128xf32>
    %146 = arith.addf %145, %13 : vector<16x128xf32>
    %cst_67 = arith.constant 5.000000e-01 : f32
    %147 = vector.broadcast %cst_67 : f32 to vector<16x128xf32>
    %148 = arith.mulf %147, %146 : vector<16x128xf32>
    %149 = math.tanh %148 : vector<16x128xf32>
    %cst_68 = arith.constant 5.000000e-01 : f32
    %150 = vector.broadcast %cst_68 : f32 to vector<16x128xf32>
    %151 = arith.mulf %150, %149 : vector<16x128xf32>
    %cst_69 = arith.constant 5.000000e-01 : f32
    %152 = vector.broadcast %cst_69 : f32 to vector<16x128xf32>
    %153 = arith.addf %151, %152 : vector<16x128xf32>
    %154 = vector.broadcast %4 : vector<16x1xf32> to vector<16x128xf32>
    %155 = arith.mulf %154, %153 : vector<16x128xf32>
    %cst_70 = arith.constant dense<0.000000e+00> : vector<128xf32>
    %156 = vector.multi_reduction <add>, %155, %cst_70 [0] : vector<16x128xf32> to vector<128xf32>
    %157 = vector.shape_cast %156 : vector<128xf32> to vector<1x128xf32>
    %158 = vector.broadcast %14 : f32 to vector<1x128xf32>
    %159 = arith.addf %157, %158 : vector<1x128xf32>
    %160 = arith.index_cast %c3_i32 : i32 to index
    %c0_71 = arith.constant 0 : index
    %c0_72 = arith.constant 0 : index
    %161 = vector.load %arg12[%160, %c0_71, %c0_72] : memref<4x1x128xf32, #tpu.memory_space<vmem>>, vector<1x1x128xf32>
    %162 = vector.shape_cast %161 : vector<1x1x128xf32> to vector<1x128xf32>
    %163 = vector.shape_cast %159 : vector<1x128xf32> to vector<1x1x128xf32>
    tpu.vector_store %arg12[%160, %c0_71, %c0_72], %163 {strides = array<i32>} : memref<4x1x128xf32, #tpu.memory_space<vmem>>, vector<1x1x128xf32>,
    %c4_i32 = arith.constant 4 : i32
    return
  }
  func.func @transform_0(%arg0: i32) -> (i32, i32) {
    %c0_i32 = arith.constant 0 : i32
    %c0_i32_0 = arith.constant 0 : i32
    return %c0_i32, %arg0 : i32, i32
  }
  func.func @transform_1(%arg0: i32) -> (i32, i32, i32) {
    %c0_i32 = arith.constant 0 : i32
    %c0_i32_0 = arith.constant 0 : i32
    %c0_i32_1 = arith.constant 0 : i32
    return %c0_i32, %c0_i32_0, %arg0 : i32, i32, i32
  }
  func.func @transform_2(%arg0: i32) -> (i32, i32) {
    %c0_i32 = arith.constant 0 : i32
    %c0_i32_0 = arith.constant 0 : i32
    %c0_i32_1 = arith.constant 0 : i32
    return %c0_i32, %c0_i32_0 : i32, i32
  }
  func.func @transform_3(%arg0: i32) -> (i32, i32) {
    %c0_i32 = arith.constant 0 : i32
    %c0_i32_0 = arith.constant 0 : i32
    %c0_i32_1 = arith.constant 0 : i32
    return %c0_i32, %c0_i32_0 : i32, i32
  }
  func.func @transform_4(%arg0: i32) -> (i32, i32) {
    %c0_i32 = arith.constant 0 : i32
    %c0_i32_0 = arith.constant 0 : i32
    %c0_i32_1 = arith.constant 0 : i32
    return %c0_i32, %c0_i32_0 : i32, i32
  }
  func.func @transform_5(%arg0: i32) -> (i32, i32) {
    %c0_i32 = arith.constant 0 : i32
    %c0_i32_0 = arith.constant 0 : i32
    %c0_i32_1 = arith.constant 0 : i32
    return %c0_i32, %c0_i32_0 : i32, i32
  }
  func.func @transform_6(%arg0: i32) -> (i32, i32) {
    %c0_i32 = arith.constant 0 : i32
    %c0_i32_0 = arith.constant 0 : i32
    %c0_i32_1 = arith.constant 0 : i32
    return %c0_i32, %c0_i32_0 : i32, i32
  }
  func.func @transform_7(%arg0: i32) -> (i32, i32) {
    %c0_i32 = arith.constant 0 : i32
    %c0_i32_0 = arith.constant 0 : i32
    %c0_i32_1 = arith.constant 0 : i32
    return %c0_i32, %c0_i32_0 : i32, i32
  }
  func.func @transform_8(%arg0: i32) -> (i32, i32) {
    %c0_i32 = arith.constant 0 : i32
    %c0_i32_0 = arith.constant 0 : i32
    %c0_i32_1 = arith.constant 0 : i32
    return %c0_i32, %c0_i32_0 : i32, i32
  }
  func.func @transform_9(%arg0: i32) -> (i32, i32) {
    %c0_i32 = arith.constant 0 : i32
    %c0_i32_0 = arith.constant 0 : i32
    %c0_i32_1 = arith.constant 0 : i32
    return %c0_i32, %c0_i32_0 : i32, i32
  }
  func.func @transform_10(%arg0: i32) -> i32 {
    %c0_i32 = arith.constant 0 : i32
    %c0_i32_0 = arith.constant 0 : i32
    return %c0_i32 : i32
  }
  func.func @transform_11(%arg0: i32) -> (i32, i32, i32) {
    %c0_i32 = arith.constant 0 : i32
    %c0_i32_0 = arith.constant 0 : i32
    %c0_i32_1 = arith.constant 0 : i32
    return %c0_i32, %c0_i32_0, %arg0 : i32, i32, i32
  }
}

</mosaic_0001>

<llo_original>
// kernel: tpu_custom_call.1
$region0: #{tpu_custom_call.1}
  #allocation0 [shape = 'u32[]', space=smem, size = 0x4, offset = 0x4, fixed_abs, tag = 'smem constant byte address 0x4 - core index']
  #allocation1 [shape = 'u32[144,128]{1,0:T(1,128)}', space=vmem, size = 0x12000, scoped, tag = 'internal scratch']
  #allocation2 [shape = 'f32[1]{0:T(128)S(6)}', space=smem, size = 0x200, scoped, tag = 'scoped memory for tpu_custom_call.1']
  %s0 = inlined_call_operand.vmem [shape: f32[1,128], index: 0, kind: input, shape index: {}]
  %s1 = inlined_call_operand.vmem [shape: f32[4,7,128], index: 1, kind: input, shape index: {}]
  %s2 = inlined_call_operand.vmem [shape: f32[16,1], index: 2, kind: input, shape index: {}]
  %s3 = inlined_call_operand.vmem [shape: f32[16,7], index: 3, kind: input, shape index: {}]
  %s4 = inlined_call_operand.vmem [shape: f32[16,1], index: 4, kind: input, shape index: {}]
  %s5 = inlined_call_operand.vmem [shape: f32[16,16], index: 5, kind: input, shape index: {}]
  %s6 = inlined_call_operand.vmem [shape: f32[16,1], index: 6, kind: input, shape index: {}]
  %s7 = inlined_call_operand.vmem [shape: f32[16,16], index: 7, kind: input, shape index: {}]
  %s8 = inlined_call_operand.vmem [shape: f32[16,1], index: 8, kind: input, shape index: {}]
  %s9 = inlined_call_operand.vmem [shape: f32[16,1], index: 9, kind: input, shape index: {}]
  %s10 = inlined_call_operand.<no memory space> [shape: f32[1], index: 10, kind: input, shape index: {}]
  %s11 = inlined_call_operand.hbm [shape: f32[4,1,128], index: 11, kind: output, shape index: {}]
  %s12 = sld [smem:[#allocation0]]
  $region54: #{tpu_custom_call.1} parent=0
    _
  %s14 = ssub.s32 1, %s12
  %s15 = scalar_select 0, %s14, %s12
  %16 = sst [smem:[#allocation2]] %s10
  $region1: #{tpu_custom_call.1} parent=0
    #allocation3 [shape = 'u8[2048]{0}', space=vmem, size = 0x800, scoped, tag = 'output window, operand 0, single buffered']
    #allocation4 [shape = 's32[1]{0}', space=sflag, size = 0x4, scoped, tag = 'scoped memory for tpu_custom_call.1']
    %17 = vsyncpa [#allocation4], 0
    // Predicated region
    $region2: #{tpu_custom_call.1} parent=1 // pred_check
      _
    $region3: #{tpu_custom_call.1} parent=1 // pred_check_branch
      %19 = sbr.rel (0) target = $region5
    $region4: #{tpu_custom_call.1} parent=1 // pred_region
      _
    $region5: #{tpu_custom_call.1} parent=1 // pred_fallthru
      _
    // Predicated region
    $region6: #{tpu_custom_call.1} parent=1 // pred_check
      _
    $region7: #{tpu_custom_call.1} parent=1 // pred_check_branch
      %21 = sbr.rel (0) target = $region9
    $region8: #{tpu_custom_call.1} parent=1 // pred_region
      _
    $region9: #{tpu_custom_call.1} parent=1 // pred_fallthru
      _
    // Predicated region
    $region10: #{tpu_custom_call.1} parent=1 // pred_check
      _
    $region11: #{tpu_custom_call.1} parent=1 // pred_check_branch
      %23 = sbr.rel (0) target = $region13
    $region12: #{tpu_custom_call.1} parent=1 // pred_region
      _
    $region13: #{tpu_custom_call.1} parent=1 // pred_fallthru
      _
    // Predicated region
    $region14: #{tpu_custom_call.1} parent=1 // pred_check
      _
    $region15: #{tpu_custom_call.1} parent=1 // pred_check_branch
      %25 = sbr.rel (0) target = $region17
    $region16: #{tpu_custom_call.1} parent=1 // pred_region
      _
    $region17: #{tpu_custom_call.1} parent=1 // pred_fallthru
      _
    // Predicated region
    $region18: #{tpu_custom_call.1} parent=1 // pred_check
      _
    $region19: #{tpu_custom_call.1} parent=1 // pred_check_branch
      %27 = sbr.rel (0) target = $region21
    $region20: #{tpu_custom_call.1} parent=1 // pred_region
      _
    $region21: #{tpu_custom_call.1} parent=1 // pred_fallthru
      _
    // Predicated region
    $region22: #{tpu_custom_call.1} parent=1 // pred_check
      _
    $region23: #{tpu_custom_call.1} parent=1 // pred_check_branch
      %29 = sbr.rel (0) target = $region25
    $region24: #{tpu_custom_call.1} parent=1 // pred_region
      _
    $region25: #{tpu_custom_call.1} parent=1 // pred_fallthru
      _
    // Predicated region
    $region26: #{tpu_custom_call.1} parent=1 // pred_check
      _
    $region27: #{tpu_custom_call.1} parent=1 // pred_check_branch
      %31 = sbr.rel (0) target = $region29
    $region28: #{tpu_custom_call.1} parent=1 // pred_region
      _
    $region29: #{tpu_custom_call.1} parent=1 // pred_fallthru
      _
    // Predicated region
    $region30: #{tpu_custom_call.1} parent=1 // pred_check
      _
    $region31: #{tpu_custom_call.1} parent=1 // pred_check_branch
      %33 = sbr.rel (0) target = $region33
    $region32: #{tpu_custom_call.1} parent=1 // pred_region
      _
    $region33: #{tpu_custom_call.1} parent=1 // pred_fallthru
      _
    // Predicated region
    $region34: #{tpu_custom_call.1} parent=1 // pred_check
      _
    $region35: #{tpu_custom_call.1} parent=1 // pred_check_branch
      %35 = sbr.rel (0) target = $region37
    $region36: #{tpu_custom_call.1} parent=1 // pred_region
      _
    $region37: #{tpu_custom_call.1} parent=1 // pred_fallthru
      _
    // Predicated region
    $region38: #{tpu_custom_call.1} parent=1 // pred_check
      _
    $region39: #{tpu_custom_call.1} parent=1 // pred_check_branch
      %37 = sbr.rel (0) target = $region41
    $region40: #{tpu_custom_call.1} parent=1 // pred_region
      _
    $region41: #{tpu_custom_call.1} parent=1 // pred_fallthru
      _
    // Predicated region
    $region42: #{tpu_custom_call.1} parent=1 // pred_check
      _
    $region43: #{tpu_custom_call.1} parent=1 // pred_check_branch
      %39 = sbr.rel (0) target = $region45
    $region44: #{tpu_custom_call.1} parent=1 // pred_region
      _
    $region45: #{tpu_custom_call.1} parent=1 // pred_fallthru
      _
    %v40 = vld [vmem:[%s2] sm:$0xff]
    %v41 = vld [vmem:[%s2 + $0x8] sm:$0xff]
    %v42 = vld [vmem:[%s3] sm:$0xff]
    %v43 = vld [vmem:[%s3 + $0x8] sm:$0xff]
    %v44 = vld [vmem:[%s5] sm:$0xff]
    %v45 = vld [vmem:[%s5 + $0x8] sm:$0xff]
    %v46 = vld [vmem:[%s7] sm:$0xff]
    %v47 = vld [vmem:[%s7 + $0x8] sm:$0xff]
    %v48 = vld [vmem:[%s9] sm:$0xff]
    %v49 = vld [vmem:[%s9 + $0x8] sm:$0xff]
    %v50 = vld [vmem:[%s4] sm:$0xff]
    %v51 = vld [vmem:[%s4 + $0x8] sm:$0xff]
    %53 = vset.pattern.permute.xlu0 0
    %54 = vperm.xlu0 %53, %v50
    %v55 = vpop.permute.xlu0 %54
    %58 = vset.pattern.permute.xlu0 0
    %59 = vperm.xlu0 %58, %v51
    %v60 = vpop.permute.xlu0 %59
    %v62 = vld [vmem:[%s6] sm:$0xff]
    %v63 = vld [vmem:[%s6 + $0x8] sm:$0xff]
    %65 = vset.pattern.permute.xlu0 0
    %66 = vperm.xlu0 %65, %v62
    %v67 = vpop.permute.xlu0 %66
    %70 = vset.pattern.permute.xlu0 0
    %71 = vperm.xlu0 %70, %v63
    %v72 = vpop.permute.xlu0 %71
    %v74 = vld [vmem:[%s8] sm:$0xff]
    %v75 = vld [vmem:[%s8 + $0x8] sm:$0xff]
    %77 = vset.pattern.permute.xlu0 0
    %78 = vperm.xlu0 %77, %v74
    %v79 = vpop.permute.xlu0 %78
    %82 = vset.pattern.permute.xlu0 0
    %83 = vperm.xlu0 %82, %v75
    %v84 = vpop.permute.xlu0 %83
    %s86 = sld [smem:[#allocation2]]
    %v87 = vld [vmem:[%s0] sm:$0x1]
    %v88 = vld [vmem:[%s1] sm:$0x7f]
    %90 = vset.pattern.permute.xlu0 0
    %91 = vperm.xlu0 %90, %v40
    %v92 = vpop.permute.xlu0 %91
    %95 = vset.pattern.permute.xlu0 0
    %96 = vperm.xlu0 %95, %v41
    %v97 = vpop.permute.xlu0 %96
    %v100 = vlaneseq
    %v101 = vshrl.u32 %v100, 7
    %v102 = vsub.s32 0, %v101
    %v103 = vrot.slane %v87, %v102
    %v105 = vmul.f32 %v92, %v103
    %v106 = vmul.f32 %v97, %v103
    %vm107 = vcmask 56320
    %v109 = vsel %vm107, %v42, 0
    %v112 = vsel %vm107, %v43, 0
    %vm114 = vcmask 1046528
    %v116 = vsel %vm114, %v88, 0
    %118 = vmatprep.subr.mxu0 0.0
    %119 = vmatpush1.msra.mxu0 %v116
    %120 = vmatprep.subr.mxu0 0.0
    %121 = vmatpush1.msra.mxu0 0.0
    %122 = vmatprep.subr.mxu0 0.0
    %123 = vmatpush1.msra.mxu0 0.0
    %124 = vmatprep.subr.mxu0 0.0
    %125 = vmatpush1.msra.mxu0 0.0
    %126 = vmatprep.subr.mxu0 0.0
    %127 = vmatpush1.msra.mxu0 0.0
    %128 = vmatprep.subr.mxu0 0.0
    %129 = vmatpush1.msra.mxu0 0.0
    %130 = vmatprep.subr.mxu0 0.0
    %131 = vmatpush1.msra.mxu0 0.0
    %132 = vmatprep.subr.mxu0 0.0
    %133 = vmatpush1.msra.mxu0 0.0
    %134 = vmatprep.subr.mxu0 0.0
    %135 = vmatpush1.msra.mxu0 0.0
    %136 = vmatprep.subr.mxu0 0.0
    %137 = vmatpush1.msra.mxu0 0.0
    %138 = vmatprep.subr.mxu0 0.0
    %139 = vmatpush1.msra.mxu0 0.0
    %140 = vmatprep.subr.mxu0 0.0
    %141 = vmatpush1.msra.mxu0 0.0
    %142 = vmatprep.subr.mxu0 0.0
    %143 = vmatpush1.msra.mxu0 0.0
    %144 = vmatprep.subr.mxu0 0.0
    %145 = vmatpush1.msra.mxu0 0.0
    %146 = vmatprep.subr.mxu0 0.0
    %147 = vmatpush1.msra.mxu0 0.0
    %148 = vmatprep.subr.mxu0 0.0
    %149 = vmatpush1.msra.mxu0 0.0
    %150 = vmatprep.subr.mxu0 0.0
    %151 = vmatpush1.msra.mxu0 0.0
    %152 = vmatprep.subr.mxu0 0.0
    %153 = vmatpush1.msra.mxu0 0.0
    %154 = vmatprep.subr.mxu0 0.0
    %155 = vmatpush1.msra.mxu0 0.0
    %156 = vmatprep.subr.mxu0 0.0
    %157 = vmatpush1.msra.mxu0 0.0
    %158 = vmatprep.subr.mxu0 0.0
    %159 = vmatpush1.msra.mxu0 0.0
    %160 = vmatprep.subr.mxu0 0.0
    %161 = vmatpush1.msra.mxu0 0.0
    %162 = vmatprep.subr.mxu0 0.0
    %163 = vmatpush1.msra.mxu0 0.0
    %164 = vmatprep.subr.mxu0 0.0
    %165 = vmatpush1.msra.mxu0 0.0
    %166 = vmatprep.subr.mxu0 0.0
    %167 = vmatpush1.msra.mxu0 0.0
    %168 = vmatprep.subr.mxu0 0.0
    %169 = vmatpush1.msra.mxu0 0.0
    %170 = vmatprep.subr.mxu0 0.0
    %171 = vmatpush1.msra.mxu0 0.0
    %172 = vmatprep.subr.mxu0 0.0
    %173 = vmatpush1.msra.mxu0 0.0
    %174 = vmatprep.subr.mxu0 0.0
    %175 = vmatpush1.msra.mxu0 0.0
    %176 = vmatprep.subr.mxu0 0.0
    %177 = vmatpush1.msra.mxu0 0.0
    %178 = vmatprep.subr.mxu0 0.0
    %179 = vmatpush1.msra.mxu0 0.0
    %180 = vmatprep.subr.mxu0 0.0
    %181 = vmatpush1.msra.mxu0 0.0
    %182 = vmatprep.mubr.f32.mxu0 0.0
    %183 = vmatmul.mubr.f32.gmra.mrb[0].mxu0 %v109
    %v184 = vpop.f32.mrb[0].mxu0
    %v185 = vadd.f32 0.0, %v184
    %v186 = vpop.f32.mrb[0].mxu0
    %187 = vmatprep.mubr.f32.mxu0 0.0
    %188 = vmatmul.mubr.f32.gmra.mrb[0].mxu0 %v112
    %v189 = vpop.f32.mrb[0].mxu0
    %v190 = vadd.f32 0.0, %v189
    %v191 = vpop.f32.mrb[0].mxu0
    %192 = vdwg.mxu0
    %v193 = vadd.f32 %v105, %v185
    %v194 = vadd.f32 %v106, %v190
    %v195 = vadd.f32 %v193, %v55
    %v196 = vadd.f32 %v194, %v60
    %vm197 = vcmask 130048
    %v199 = vsel %vm197, %v44, 0
    %v202 = vsel %vm197, %v45, 0
    %204 = vmatprep.subr.mxu0 0.0
    %205 = vmatpush1.msra.mxu0 %v195
    %206 = vmatprep.subr.mxu0 0.0
    %207 = vmatpush1.msra.mxu0 %v196
    %208 = vmatprep.subr.mxu0 0.0
    %209 = vmatpush1.msra.mxu0 0.0
    %210 = vmatprep.subr.mxu0 0.0
    %211 = vmatpush1.msra.mxu0 0.0
    %212 = vmatprep.subr.mxu0 0.0
    %213 = vmatpush1.msra.mxu0 0.0
    %214 = vmatprep.subr.mxu0 0.0
    %215 = vmatpush1.msra.mxu0 0.0
    %216 = vmatprep.subr.mxu0 0.0
    %217 = vmatpush1.msra.mxu0 0.0
    %218 = vmatprep.subr.mxu0 0.0
    %219 = vmatpush1.msra.mxu0 0.0
    %220 = vmatprep.subr.mxu0 0.0
    %221 = vmatpush1.msra.mxu0 0.0
    %222 = vmatprep.subr.mxu0 0.0
    %223 = vmatpush1.msra.mxu0 0.0
    %224 = vmatprep.subr.mxu0 0.0
    %225 = vmatpush1.msra.mxu0 0.0
    %226 = vmatprep.subr.mxu0 0.0
    %227 = vmatpush1.msra.mxu0 0.0
    %228 = vmatprep.subr.mxu0 0.0
    %229 = vmatpush1.msra.mxu0 0.0
    %230 = vmatprep.subr.mxu0 0.0
    %231 = vmatpush1.msra.mxu0 0.0
    %232 = vmatprep.subr.mxu0 0.0
    %233 = vmatpush1.msra.mxu0 0.0
    %234 = vmatprep.subr.mxu0 0.0
    %235 = vmatpush1.msra.mxu0 0.0
    %236 = vmatprep.subr.mxu0 0.0
    %237 = vmatpush1.msra.mxu0 0.0
    %238 = vmatprep.subr.mxu0 0.0
    %239 = vmatpush1.msra.mxu0 0.0
    %240 = vmatprep.subr.mxu0 0.0
    %241 = vmatpush1.msra.mxu0 0.0
    %242 = vmatprep.subr.mxu0 0.0
    %243 = vmatpush1.msra.mxu0 0.0
    %244 = vmatprep.subr.mxu0 0.0
    %245 = vmatpush1.msra.mxu0 0.0
    %246 = vmatprep.subr.mxu0 0.0
    %247 = vmatpush1.msra.mxu0 0.0
    %248 = vmatprep.subr.mxu0 0.0
    %249 = vmatpush1.msra.mxu0 0.0
    %250 = vmatprep.subr.mxu0 0.0
    %251 = vmatpush1.msra.mxu0 0.0
    %252 = vmatprep.subr.mxu0 0.0
    %253 = vmatpush1.msra.mxu0 0.0
    %254 = vmatprep.subr.mxu0 0.0
    %255 = vmatpush1.msra.mxu0 0.0
    %256 = vmatprep.subr.mxu0 0.0
    %257 = vmatpush1.msra.mxu0 0.0
    %258 = vmatprep.subr.mxu0 0.0
    %259 = vmatpush1.msra.mxu0 0.0
    %260 = vmatprep.subr.mxu0 0.0
    %261 = vmatpush1.msra.mxu0 0.0
    %262 = vmatprep.subr.mxu0 0.0
    %263 = vmatpush1.msra.mxu0 0.0
    %264 = vmatprep.subr.mxu0 0.0
    %265 = vmatpush1.msra.mxu0 0.0
    %266 = vmatprep.subr.mxu0 0.0
    %267 = vmatpush1.msra.mxu0 0.0
    %268 = vmatprep.mubr.f32.mxu0 0.0
    %269 = vmatmul.mubr.f32.gmra.mrb[0].mxu0 %v199
    %v270 = vpop.f32.mrb[0].mxu0
    %v271 = vadd.f32 %v67, %v270
    %v272 = vpop.f32.mrb[0].mxu0
    %273 = vmatprep.mubr.f32.mxu0 0.0
    %274 = vmatmul.mubr.f32.gmra.mrb[0].mxu0 %v202
    %v275 = vpop.f32.mrb[0].mxu0
    %v276 = vadd.f32 %v72, %v275
    %v277 = vpop.f32.mrb[0].mxu0
    %278 = vdwg.mxu0
    %v279 = vmul.f32 %v271, 0.5
    %v280 = vmul.f32 %v276, 0.5
    %v281 = vtanh.pop %v279
    %v282 = vtanh.pop %v280
    %v283 = vmul.f32 %v281, 0.5
    %v284 = vmul.f32 %v282, 0.5
    %v285 = vadd.f32 %v283, 0.5
    %v286 = vadd.f32 %v284, 0.5
    %v288 = vsel %vm197, %v46, 0
    %v291 = vsel %vm197, %v47, 0
    %293 = vmatprep.subr.mxu0 0.0
    %294 = vmatpush1.msra.mxu0 %v285
    %295 = vmatprep.subr.mxu0 0.0
    %296 = vmatpush1.msra.mxu0 %v286
    %297 = vmatprep.subr.mxu0 0.0
    %298 = vmatpush1.msra.mxu0 0.0
    %299 = vmatprep.subr.mxu0 0.0
    %300 = vmatpush1.msra.mxu0 0.0
    %301 = vmatprep.subr.mxu0 0.0
    %302 = vmatpush1.msra.mxu0 0.0
    %303 = vmatprep.subr.mxu0 0.0
    %304 = vmatpush1.msra.mxu0 0.0
    %305 = vmatprep.subr.mxu0 0.0
    %306 = vmatpush1.msra.mxu0 0.0
    %307 = vmatprep.subr.mxu0 0.0
    %308 = vmatpush1.msra.mxu0 0.0
    %309 = vmatprep.subr.mxu0 0.0
    %310 = vmatpush1.msra.mxu0 0.0
    %311 = vmatprep.subr.mxu0 0.0
    %312 = vmatpush1.msra.mxu0 0.0
    %313 = vmatprep.subr.mxu0 0.0
    %314 = vmatpush1.msra.mxu0 0.0
    %315 = vmatprep.subr.mxu0 0.0
    %316 = vmatpush1.msra.mxu0 0.0
    %317 = vmatprep.subr.mxu0 0.0
    %318 = vmatpush1.msra.mxu0 0.0
    %319 = vmatprep.subr.mxu0 0.0
    %320 = vmatpush1.msra.mxu0 0.0
    %321 = vmatprep.subr.mxu0 0.0
    %322 = vmatpush1.msra.mxu0 0.0
    %323 = vmatprep.subr.mxu0 0.0
    %324 = vmatpush1.msra.mxu0 0.0
    %325 = vmatprep.subr.mxu0 0.0
    %326 = vmatpush1.msra.mxu0 0.0
    %327 = vmatprep.subr.mxu0 0.0
    %328 = vmatpush1.msra.mxu0 0.0
    %329 = vmatprep.subr.mxu0 0.0
    %330 = vmatpush1.msra.mxu0 0.0
    %331 = vmatprep.subr.mxu0 0.0
    %332 = vmatpush1.msra.mxu0 0.0
    %333 = vmatprep.subr.mxu0 0.0
    %334 = vmatpush1.msra.mxu0 0.0
    %335 = vmatprep.subr.mxu0 0.0
    %336 = vmatpush1.msra.mxu0 0.0
    %337 = vmatprep.subr.mxu0 0.0
    %338 = vmatpush1.msra.mxu0 0.0
    %339 = vmatprep.subr.mxu0 0.0
    %340 = vmatpush1.msra.mxu0 0.0
    %341 = vmatprep.subr.mxu0 0.0
    %342 = vmatpush1.msra.mxu0 0.0
    %343 = vmatprep.subr.mxu0 0.0
    %344 = vmatpush1.msra.mxu0 0.0
    %345 = vmatprep.subr.mxu0 0.0
    %346 = vmatpush1.msra.mxu0 0.0
    %347 = vmatprep.subr.mxu0 0.0
    %348 = vmatpush1.msra.mxu0 0.0
    %349 = vmatprep.subr.mxu0 0.0
    %350 = vmatpush1.msra.mxu0 0.0
    %351 = vmatprep.subr.mxu0 0.0
    %352 = vmatpush1.msra.mxu0 0.0
    %353 = vmatprep.subr.mxu0 0.0
    %354 = vmatpush1.msra.mxu0 0.0
    %355 = vmatprep.subr.mxu0 0.0
    %356 = vmatpush1.msra.mxu0 0.0
    %357 = vmatprep.mubr.f32.mxu0 0.0
    %358 = vmatmul.mubr.f32.gmra.mrb[0].mxu0 %v288
    %v359 = vpop.f32.mrb[0].mxu0
    %v360 = vadd.f32 %v79, %v359
    %v361 = vpop.f32.mrb[0].mxu0
    %362 = vmatprep.mubr.f32.mxu0 0.0
    %363 = vmatmul.mubr.f32.gmra.mrb[0].mxu0 %v291
    %v364 = vpop.f32.mrb[0].mxu0
    %v365 = vadd.f32 %v84, %v364
    %v366 = vpop.f32.mrb[0].mxu0
    %367 = vdwg.mxu0
    %v368 = vmul.f32 %v360, 0.5
    %v369 = vmul.f32 %v365, 0.5
    %v370 = vtanh.pop %v368
    %v371 = vtanh.pop %v369
    %v372 = vmul.f32 %v370, 0.5
    %v373 = vmul.f32 %v371, 0.5
    %v374 = vadd.f32 %v372, 0.5
    %v375 = vadd.f32 %v373, 0.5
    %377 = vset.pattern.permute.xlu0 0
    %378 = vperm.xlu0 %377, %v48
    %v379 = vpop.permute.xlu0 %378
    %382 = vset.pattern.permute.xlu0 0
    %383 = vperm.xlu0 %382, %v49
    %v384 = vpop.permute.xlu0 %383
    %v386 = vmul.f32 %v379, %v374
    %v387 = vmul.f32 %v384, %v375
    %v388 = vadd.f32 %v386, %v387
    %v389 = vrot.slane %v388, 4
    %v390 = vadd.f32 %v388, %v389
    %v391 = vrot.slane %v390, 2
    %v392 = vadd.f32 %v390, %v391
    %v393 = vrot.slane %v392, 1
    %v394 = vadd.f32 %v392, %v393
    %v395 = vstv %s86
    %v396 = vadd.f32 %v394, %v395
    %397 = vst [vmem:[#allocation3] sm:$0x1] %v396
    %s398 = scalar_lea.vmem %s1, 8
    %v399 = vld [vmem:[%s398] sm:$0x7f]
    %v400 = vmul.f32 %v92, %v396
    %v401 = vmul.f32 %v97, %v396
    %v403 = vsel %vm114, %v399, 0
    %405 = vmatprep.subr.mxu0 0.0
    %406 = vmatpush1.msra.mxu0 %v403
    %407 = vmatprep.subr.mxu0 0.0
    %408 = vmatpush1.msra.mxu0 0.0
    %409 = vmatprep.subr.mxu0 0.0
    %410 = vmatpush1.msra.mxu0 0.0
    %411 = vmatprep.subr.mxu0 0.0
    %412 = vmatpush1.msra.mxu0 0.0
    %413 = vmatprep.subr.mxu0 0.0
    %414 = vmatpush1.msra.mxu0 0.0
    %415 = vmatprep.subr.mxu0 0.0
    %416 = vmatpush1.msra.mxu0 0.0
    %417 = vmatprep.subr.mxu0 0.0
    %418 = vmatpush1.msra.mxu0 0.0
    %419 = vmatprep.subr.mxu0 0.0
    %420 = vmatpush1.msra.mxu0 0.0
    %421 = vmatprep.subr.mxu0 0.0
    %422 = vmatpush1.msra.mxu0 0.0
    %423 = vmatprep.subr.mxu0 0.0
    %424 = vmatpush1.msra.mxu0 0.0
    %425 = vmatprep.subr.mxu0 0.0
    %426 = vmatpush1.msra.mxu0 0.0
    %427 = vmatprep.subr.mxu0 0.0
    %428 = vmatpush1.msra.mxu0 0.0
    %429 = vmatprep.subr.mxu0 0.0
    %430 = vmatpush1.msra.mxu0 0.0
    %431 = vmatprep.subr.mxu0 0.0
    %432 = vmatpush1.msra.mxu0 0.0
    %433 = vmatprep.subr.mxu0 0.0
    %434 = vmatpush1.msra.mxu0 0.0
    %435 = vmatprep.subr.mxu0 0.0
    %436 = vmatpush1.msra.mxu0 0.0
    %437 = vmatprep.subr.mxu0 0.0
    %438 = vmatpush1.msra.mxu0 0.0
    %439 = vmatprep.subr.mxu0 0.0
    %440 = vmatpush1.msra.mxu0 0.0
    %441 = vmatprep.subr.mxu0 0.0
    %442 = vmatpush1.msra.mxu0 0.0
    %443 = vmatprep.subr.mxu0 0.0
    %444 = vmatpush1.msra.mxu0 0.0
    %445 = vmatprep.subr.mxu0 0.0
    %446 = vmatpush1.msra.mxu0 0.0
    %447 = vmatprep.subr.mxu0 0.0
    %448 = vmatpush1.msra.mxu0 0.0
    %449 = vmatprep.subr.mxu0 0.0
    %450 = vmatpush1.msra.mxu0 0.0
    %451 = vmatprep.subr.mxu0 0.0
    %452 = vmatpush1.msra.mxu0 0.0
    %453 = vmatprep.subr.mxu0 0.0
    %454 = vmatpush1.msra.mxu0 0.0
    %455 = vmatprep.subr.mxu0 0.0
    %456 = vmatpush1.msra.mxu0 0.0
    %457 = vmatprep.subr.mxu0 0.0
    %458 = vmatpush1.msra.mxu0 0.0
    %459 = vmatprep.subr.mxu0 0.0
    %460 = vmatpush1.msra.mxu0 0.0
    %461 = vmatprep.subr.mxu0 0.0
    %462 = vmatpush1.msra.mxu0 0.0
    %463 = vmatprep.subr.mxu0 0.0
    %464 = vmatpush1.msra.mxu0 0.0
    %465 = vmatprep.subr.mxu0 0.0
    %466 = vmatpush1.msra.mxu0 0.0
    %467 = vmatprep.subr.mxu0 0.0
    %468 = vmatpush1.msra.mxu0 0.0
    %469 = vmatprep.mubr.f32.mxu0 0.0
    %470 = vmatmul.mubr.f32.gmra.mrb[0].mxu0 %v109
    %v471 = vpop.f32.mrb[0].mxu0
    %v472 = vadd.f32 0.0, %v471
    %v473 = vpop.f32.mrb[0].mxu0
    %474 = vmatprep.mubr.f32.mxu0 0.0
    %475 = vmatmul.mubr.f32.gmra.mrb[0].mxu0 %v112
    %v476 = vpop.f32.mrb[0].mxu0
    %v477 = vadd.f32 0.0, %v476
    %v478 = vpop.f32.mrb[0].mxu0
    %479 = vdwg.mxu0
    %v480 = vadd.f32 %v400, %v472
    %v481 = vadd.f32 %v401, %v477
    %v482 = vadd.f32 %v480, %v55
    %v483 = vadd.f32 %v481, %v60
    %484 = vmatprep.subr.mxu0 0.0
    %485 = vmatpush1.msra.mxu0 %v482
    %486 = vmatprep.subr.mxu0 0.0
    %487 = vmatpush1.msra.mxu0 %v483
    %488 = vmatprep.subr.mxu0 0.0
    %489 = vmatpush1.msra.mxu0 0.0
    %490 = vmatprep.subr.mxu0 0.0
    %491 = vmatpush1.msra.mxu0 0.0
    %492 = vmatprep.subr.mxu0 0.0
    %493 = vmatpush1.msra.mxu0 0.0
    %494 = vmatprep.subr.mxu0 0.0
    %495 = vmatpush1.msra.mxu0 0.0
    %496 = vmatprep.subr.mxu0 0.0
    %497 = vmatpush1.msra.mxu0 0.0
    %498 = vmatprep.subr.mxu0 0.0
    %499 = vmatpush1.msra.mxu0 0.0
    %500 = vmatprep.subr.mxu0 0.0
    %501 = vmatpush1.msra.mxu0 0.0
    %502 = vmatprep.subr.mxu0 0.0
    %503 = vmatpush1.msra.mxu0 0.0
    %504 = vmatprep.subr.mxu0 0.0
    %505 = vmatpush1.msra.mxu0 0.0
    %506 = vmatprep.subr.mxu0 0.0
    %507 = vmatpush1.msra.mxu0 0.0
    %508 = vmatprep.subr.mxu0 0.0
    %509 = vmatpush1.msra.mxu0 0.0
    %510 = vmatprep.subr.mxu0 0.0
    %511 = vmatpush1.msra.mxu0 0.0
    %512 = vmatprep.subr.mxu0 0.0
    %513 = vmatpush1.msra.mxu0 0.0
    %514 = vmatprep.subr.mxu0 0.0
    %515 = vmatpush1.msra.mxu0 0.0
    %516 = vmatprep.subr.mxu0 0.0
    %517 = vmatpush1.msra.mxu0 0.0
    %518 = vmatprep.subr.mxu0 0.0
    %519 = vmatpush1.msra.mxu0 0.0
    %520 = vmatprep.subr.mxu0 0.0
    %521 = vmatpush1.msra.mxu0 0.0
    %522 = vmatprep.subr.mxu0 0.0
    %523 = vmatpush1.msra.mxu0 0.0
    %524 = vmatprep.subr.mxu0 0.0
    %525 = vmatpush1.msra.mxu0 0.0
    %526 = vmatprep.subr.mxu0 0.0
    %527 = vmatpush1.msra.mxu0 0.0
    %528 = vmatprep.subr.mxu0 0.0
    %529 = vmatpush1.msra.mxu0 0.0
    %530 = vmatprep.subr.mxu0 0.0
    %531 = vmatpush1.msra.mxu0 0.0
    %532 = vmatprep.subr.mxu0 0.0
    %533 = vmatpush1.msra.mxu0 0.0
    %534 = vmatprep.subr.mxu0 0.0
    %535 = vmatpush1.msra.mxu0 0.0
    %536 = vmatprep.subr.mxu0 0.0
    %537 = vmatpush1.msra.mxu0 0.0
    %538 = vmatprep.subr.mxu0 0.0
    %539 = vmatpush1.msra.mxu0 0.0
    %540 = vmatprep.subr.mxu0 0.0
    %541 = vmatpush1.msra.mxu0 0.0
    %542 = vmatprep.subr.mxu0 0.0
    %543 = vmatpush1.msra.mxu0 0.0
    %544 = vmatprep.subr.mxu0 0.0
    %545 = vmatpush1.msra.mxu0 0.0
    %546 = vmatprep.subr.mxu0 0.0
    %547 = vmatpush1.msra.mxu0 0.0
    %548 = vmatprep.mubr.f32.mxu0 0.0
    %549 = vmatmul.mubr.f32.gmra.mrb[0].mxu0 %v199
    %v550 = vpop.f32.mrb[0].mxu0
    %v551 = vadd.f32 %v67, %v550
    %v552 = vpop.f32.mrb[0].mxu0
    %553 = vmatprep.mubr.f32.mxu0 0.0
    %554 = vmatmul.mubr.f32.gmra.mrb[0].mxu0 %v202
    %v555 = vpop.f32.mrb[0].mxu0
    %v556 = vadd.f32 %v72, %v555
    %v557 = vpop.f32.mrb[0].mxu0
    %558 = vdwg.mxu0
    %v559 = vmul.f32 %v551, 0.5
    %v560 = vmul.f32 %v556, 0.5
    %v561 = vtanh.pop %v559
    %v562 = vtanh.pop %v560
    %v563 = vmul.f32 %v561, 0.5
    %v564 = vmul.f32 %v562, 0.5
    %v565 = vadd.f32 %v563, 0.5
    %v566 = vadd.f32 %v564, 0.5
    %567 = vmatprep.subr.mxu0 0.0
    %568 = vmatpush1.msra.mxu0 %v565
    %569 = vmatprep.subr.mxu0 0.0
    %570 = vmatpush1.msra.mxu0 %v566
    %571 = vmatprep.subr.mxu0 0.0
    %572 = vmatpush1.msra.mxu0 0.0
    %573 = vmatprep.subr.mxu0 0.0
    %574 = vmatpush1.msra.mxu0 0.0
    %575 = vmatprep.subr.mxu0 0.0
    %576 = vmatpush1.msra.mxu0 0.0
    %577 = vmatprep.subr.mxu0 0.0
    %578 = vmatpush1.msra.mxu0 0.0
    %579 = vmatprep.subr.mxu0 0.0
    %580 = vmatpush1.msra.mxu0 0.0
    %581 = vmatprep.subr.mxu0 0.0
    %582 = vmatpush1.msra.mxu0 0.0
    %583 = vmatprep.subr.mxu0 0.0
    %584 = vmatpush1.msra.mxu0 0.0
    %585 = vmatprep.subr.mxu0 0.0
    %586 = vmatpush1.msra.mxu0 0.0
    %587 = vmatprep.subr.mxu0 0.0
    %588 = vmatpush1.msra.mxu0 0.0
    %589 = vmatprep.subr.mxu0 0.0
    %590 = vmatpush1.msra.mxu0 0.0
    %591 = vmatprep.subr.mxu0 0.0
    %592 = vmatpush1.msra.mxu0 0.0
    %593 = vmatprep.subr.mxu0 0.0
    %594 = vmatpush1.msra.mxu0 0.0
    %595 = vmatprep.subr.mxu0 0.0
    %596 = vmatpush1.msra.mxu0 0.0
    %597 = vmatprep.subr.mxu0 0.0
    %598 = vmatpush1.msra.mxu0 0.0
    %599 = vmatprep.subr.mxu0 0.0
    %600 = vmatpush1.msra.mxu0 0.0
    %601 = vmatprep.subr.mxu0 0.0
    %602 = vmatpush1.msra.mxu0 0.0
    %603 = vmatprep.subr.mxu0 0.0
    %604 = vmatpush1.msra.mxu0 0.0
    %605 = vmatprep.subr.mxu0 0.0
    %606 = vmatpush1.msra.mxu0 0.0
    %607 = vmatprep.subr.mxu0 0.0
    %608 = vmatpush1.msra.mxu0 0.0
    %609 = vmatprep.subr.mxu0 0.0
    %610 = vmatpush1.msra.mxu0 0.0
    %611 = vmatprep.subr.mxu0 0.0
    %612 = vmatpush1.msra.mxu0 0.0
    %613 = vmatprep.subr.mxu0 0.0
    %614 = vmatpush1.msra.mxu0 0.0
    %615 = vmatprep.subr.mxu0 0.0
    %616 = vmatpush1.msra.mxu0 0.0
    %617 = vmatprep.subr.mxu0 0.0
    %618 = vmatpush1.msra.mxu0 0.0
    %619 = vmatprep.subr.mxu0 0.0
    %620 = vmatpush1.msra.mxu0 0.0
    %621 = vmatprep.subr.mxu0 0.0
    %622 = vmatpush1.msra.mxu0 0.0
    %623 = vmatprep.subr.mxu0 0.0
    %624 = vmatpush1.msra.mxu0 0.0
    %625 = vmatprep.subr.mxu0 0.0
    %626 = vmatpush1.msra.mxu0 0.0
    %627 = vmatprep.subr.mxu0 0.0
    %628 = vmatpush1.msra.mxu0 0.0
    %629 = vmatprep.subr.mxu0 0.0
    %630 = vmatpush1.msra.mxu0 0.0
    %631 = vmatprep.mubr.f32.mxu0 0.0
    %632 = vmatmul.mubr.f32.gmra.mrb[0].mxu0 %v288
    %v633 = vpop.f32.mrb[0].mxu0
    %v634 = vadd.f32 %v79, %v633
    %v635 = vpop.f32.mrb[0].mxu0
    %636 = vmatprep.mubr.f32.mxu0 0.0
    %637 = vmatmul.mubr.f32.gmra.mrb[0].mxu0 %v291
    %v638 = vpop.f32.mrb[0].mxu0
    %v639 = vadd.f32 %v84, %v638
    %v640 = vpop.f32.mrb[0].mxu0
    %641 = vdwg.mxu0
    %v642 = vmul.f32 %v634, 0.5
    %v643 = vmul.f32 %v639, 0.5
    %v644 = vtanh.pop %v642
    %v645 = vtanh.pop %v643
    %v646 = vmul.f32 %v644, 0.5
    %v647 = vmul.f32 %v645, 0.5
    %v648 = vadd.f32 %v646, 0.5
    %v649 = vadd.f32 %v647, 0.5
    %v650 = vmul.f32 %v379, %v648
    %v651 = vmul.f32 %v384, %v649
    %v652 = vadd.f32 %v650, %v651
    %v653 = vrot.slane %v652, 4
    %v654 = vadd.f32 %v652, %v653
    %v655 = vrot.slane %v654, 2
    %v656 = vadd.f32 %v654, %v655
    %v657 = vrot.slane %v656, 1
    %v658 = vadd.f32 %v656, %v657
    %v659 = vadd.f32 %v658, %v395
    %s660 = scalar_lea.vmem [#allocation3], 1
    %661 = vst [vmem:[%s660] sm:$0x1] %v659
    %s662 = scalar_lea.vmem %s1, 16
    %v663 = vld [vmem:[%s662] sm:$0x7f]
    %v664 = vmul.f32 %v92, %v659
    %v665 = vmul.f32 %v97, %v659
    %v667 = vsel %vm114, %v663, 0
    %669 = vmatprep.subr.mxu0 0.0
    %670 = vmatpush1.msra.mxu0 %v667
    %671 = vmatprep.subr.mxu0 0.0
    %672 = vmatpush1.msra.mxu0 0.0
    %673 = vmatprep.subr.mxu0 0.0
    %674 = vmatpush1.msra.mxu0 0.0
    %675 = vmatprep.subr.mxu0 0.0
    %676 = vmatpush1.msra.mxu0 0.0
    %677 = vmatprep.subr.mxu0 0.0
    %678 = vmatpush1.msra.mxu0 0.0
    %679 = vmatprep.subr.mxu0 0.0
    %680 = vmatpush1.msra.mxu0 0.0
    %681 = vmatprep.subr.mxu0 0.0
    %682 = vmatpush1.msra.mxu0 0.0
    %683 = vmatprep.subr.mxu0 0.0
    %684 = vmatpush1.msra.mxu0 0.0
    %685 = vmatprep.subr.mxu0 0.0
    %686 = vmatpush1.msra.mxu0 0.0
    %687 = vmatprep.subr.mxu0 0.0
    %688 = vmatpush1.msra.mxu0 0.0
    %689 = vmatprep.subr.mxu0 0.0
    %690 = vmatpush1.msra.mxu0 0.0
    %691 = vmatprep.subr.mxu0 0.0
    %692 = vmatpush1.msra.mxu0 0.0
    %693 = vmatprep.subr.mxu0 0.0
    %694 = vmatpush1.msra.mxu0 0.0
    %695 = vmatprep.subr.mxu0 0.0
    %696 = vmatpush1.msra.mxu0 0.0
    %697 = vmatprep.subr.mxu0 0.0
    %698 = vmatpush1.msra.mxu0 0.0
    %699 = vmatprep.subr.mxu0 0.0
    %700 = vmatpush1.msra.mxu0 0.0
    %701 = vmatprep.subr.mxu0 0.0
    %702 = vmatpush1.msra.mxu0 0.0
    %703 = vmatprep.subr.mxu0 0.0
    %704 = vmatpush1.msra.mxu0 0.0
    %705 = vmatprep.subr.mxu0 0.0
    %706 = vmatpush1.msra.mxu0 0.0
    %707 = vmatprep.subr.mxu0 0.0
    %708 = vmatpush1.msra.mxu0 0.0
    %709 = vmatprep.subr.mxu0 0.0
    %710 = vmatpush1.msra.mxu0 0.0
    %711 = vmatprep.subr.mxu0 0.0
    %712 = vmatpush1.msra.mxu0 0.0
    %713 = vmatprep.subr.mxu0 0.0
    %714 = vmatpush1.msra.mxu0 0.0
    %715 = vmatprep.subr.mxu0 0.0
    %716 = vmatpush1.msra.mxu0 0.0
    %717 = vmatprep.subr.mxu0 0.0
    %718 = vmatpush1.msra.mxu0 0.0
    %719 = vmatprep.subr.mxu0 0.0
    %720 = vmatpush1.msra.mxu0 0.0
    %721 = vmatprep.subr.mxu0 0.0
    %722 = vmatpush1.msra.mxu0 0.0
    %723 = vmatprep.subr.mxu0 0.0
    %724 = vmatpush1.msra.mxu0 0.0
    %725 = vmatprep.subr.mxu0 0.0
    %726 = vmatpush1.msra.mxu0 0.0
    %727 = vmatprep.subr.mxu0 0.0
    %728 = vmatpush1.msra.mxu0 0.0
    %729 = vmatprep.subr.mxu0 0.0
    %730 = vmatpush1.msra.mxu0 0.0
    %731 = vmatprep.subr.mxu0 0.0
    %732 = vmatpush1.msra.mxu0 0.0
    %733 = vmatprep.mubr.f32.mxu0 0.0
    %734 = vmatmul.mubr.f32.gmra.mrb[0].mxu0 %v109
    %v735 = vpop.f32.mrb[0].mxu0
    %v736 = vadd.f32 0.0, %v735
    %v737 = vpop.f32.mrb[0].mxu0
    %738 = vmatprep.mubr.f32.mxu0 0.0
    %739 = vmatmul.mubr.f32.gmra.mrb[0].mxu0 %v112
    %v740 = vpop.f32.mrb[0].mxu0
    %v741 = vadd.f32 0.0, %v740
    %v742 = vpop.f32.mrb[0].mxu0
    %743 = vdwg.mxu0
    %v744 = vadd.f32 %v664, %v736
    %v745 = vadd.f32 %v665, %v741
    %v746 = vadd.f32 %v744, %v55
    %v747 = vadd.f32 %v745, %v60
    %748 = vmatprep.subr.mxu0 0.0
    %749 = vmatpush1.msra.mxu0 %v746
    %750 = vmatprep.subr.mxu0 0.0
    %751 = vmatpush1.msra.mxu0 %v747
    %752 = vmatprep.subr.mxu0 0.0
    %753 = vmatpush1.msra.mxu0 0.0
    %754 = vmatprep.subr.mxu0 0.0
    %755 = vmatpush1.msra.mxu0 0.0
    %756 = vmatprep.subr.mxu0 0.0
    %757 = vmatpush1.msra.mxu0 0.0
    %758 = vmatprep.subr.mxu0 0.0
    %759 = vmatpush1.msra.mxu0 0.0
    %760 = vmatprep.subr.mxu0 0.0
    %761 = vmatpush1.msra.mxu0 0.0
    %762 = vmatprep.subr.mxu0 0.0
    %763 = vmatpush1.msra.mxu0 0.0
    %764 = vmatprep.subr.mxu0 0.0
    %765 = vmatpush1.msra.mxu0 0.0
    %766 = vmatprep.subr.mxu0 0.0
    %767 = vmatpush1.msra.mxu0 0.0
    %768 = vmatprep.subr.mxu0 0.0
    %769 = vmatpush1.msra.mxu0 0.0
    %770 = vmatprep.subr.mxu0 0.0
    %771 = vmatpush1.msra.mxu0 0.0
    %772 = vmatprep.subr.mxu0 0.0
    %773 = vmatpush1.msra.mxu0 0.0
    %774 = vmatprep.subr.mxu0 0.0
    %775 = vmatpush1.msra.mxu0 0.0
    %776 = vmatprep.subr.mxu0 0.0
    %777 = vmatpush1.msra.mxu0 0.0
    %778 = vmatprep.subr.mxu0 0.0
    %779 = vmatpush1.msra.mxu0 0.0
    %780 = vmatprep.subr.mxu0 0.0
    %781 = vmatpush1.msra.mxu0 0.0
    %782 = vmatprep.subr.mxu0 0.0
    %783 = vmatpush1.msra.mxu0 0.0
    %784 = vmatprep.subr.mxu0 0.0
    %785 = vmatpush1.msra.mxu0 0.0
    %786 = vmatprep.subr.mxu0 0.0
    %787 = vmatpush1.msra.mxu0 0.0
    %788 = vmatprep.subr.mxu0 0.0
    %789 = vmatpush1.msra.mxu0 0.0
    %790 = vmatprep.subr.mxu0 0.0
    %791 = vmatpush1.msra.mxu0 0.0
    %792 = vmatprep.subr.mxu0 0.0
    %793 = vmatpush1.msra.mxu0 0.0
    %794 = vmatprep.subr.mxu0 0.0
    %795 = vmatpush1.msra.mxu0 0.0
    %796 = vmatprep.subr.mxu0 0.0
    %797 = vmatpush1.msra.mxu0 0.0
    %798 = vmatprep.subr.mxu0 0.0
    %799 = vmatpush1.msra.mxu0 0.0
    %800 = vmatprep.subr.mxu0 0.0
    %801 = vmatpush1.msra.mxu0 0.0
    %802 = vmatprep.subr.mxu0 0.0
    %803 = vmatpush1.msra.mxu0 0.0
    %804 = vmatprep.subr.mxu0 0.0
    %805 = vmatpush1.msra.mxu0 0.0
    %806 = vmatprep.subr.mxu0 0.0
    %807 = vmatpush1.msra.mxu0 0.0
    %808 = vmatprep.subr.mxu0 0.0
    %809 = vmatpush1.msra.mxu0 0.0
    %810 = vmatprep.subr.mxu0 0.0
    %811 = vmatpush1.msra.mxu0 0.0
    %812 = vmatprep.mubr.f32.mxu0 0.0
    %813 = vmatmul.mubr.f32.gmra.mrb[0].mxu0 %v199
    %v814 = vpop.f32.mrb[0].mxu0
    %v815 = vadd.f32 %v67, %v814
    %v816 = vpop.f32.mrb[0].mxu0
    %817 = vmatprep.mubr.f32.mxu0 0.0
    %818 = vmatmul.mubr.f32.gmra.mrb[0].mxu0 %v202
    %v819 = vpop.f32.mrb[0].mxu0
    %v820 = vadd.f32 %v72, %v819
    %v821 = vpop.f32.mrb[0].mxu0
    %822 = vdwg.mxu0
    %v823 = vmul.f32 %v815, 0.5
    %v824 = vmul.f32 %v820, 0.5
    %v825 = vtanh.pop %v823
    %v826 = vtanh.pop %v824
    %v827 = vmul.f32 %v825, 0.5
    %v828 = vmul.f32 %v826, 0.5
    %v829 = vadd.f32 %v827, 0.5
    %v830 = vadd.f32 %v828, 0.5
    %831 = vmatprep.subr.mxu0 0.0
    %832 = vmatpush1.msra.mxu0 %v829
    %833 = vmatprep.subr.mxu0 0.0
    %834 = vmatpush1.msra.mxu0 %v830
    %835 = vmatprep.subr.mxu0 0.0
    %836 = vmatpush1.msra.mxu0 0.0
    %837 = vmatprep.subr.mxu0 0.0
    %838 = vmatpush1.msra.mxu0 0.0
    %839 = vmatprep.subr.mxu0 0.0
    %840 = vmatpush1.msra.mxu0 0.0
    %841 = vmatprep.subr.mxu0 0.0
    %842 = vmatpush1.msra.mxu0 0.0
    %843 = vmatprep.subr.mxu0 0.0
    %844 = vmatpush1.msra.mxu0 0.0
    %845 = vmatprep.subr.mxu0 0.0
    %846 = vmatpush1.msra.mxu0 0.0
    %847 = vmatprep.subr.mxu0 0.0
    %848 = vmatpush1.msra.mxu0 0.0
    %849 = vmatprep.subr.mxu0 0.0
    %850 = vmatpush1.msra.mxu0 0.0
    %851 = vmatprep.subr.mxu0 0.0
    %852 = vmatpush1.msra.mxu0 0.0
    %853 = vmatprep.subr.mxu0 0.0
    %854 = vmatpush1.msra.mxu0 0.0
    %855 = vmatprep.subr.mxu0 0.0
    %856 = vmatpush1.msra.mxu0 0.0
    %857 = vmatprep.subr.mxu0 0.0
    %858 = vmatpush1.msra.mxu0 0.0
    %859 = vmatprep.subr.mxu0 0.0
    %860 = vmatpush1.msra.mxu0 0.0
    %861 = vmatprep.subr.mxu0 0.0
    %862 = vmatpush1.msra.mxu0 0.0
    %863 = vmatprep.subr.mxu0 0.0
    %864 = vmatpush1.msra.mxu0 0.0
    %865 = vmatprep.subr.mxu0 0.0
    %866 = vmatpush1.msra.mxu0 0.0
    %867 = vmatprep.subr.mxu0 0.0
    %868 = vmatpush1.msra.mxu0 0.0
    %869 = vmatprep.subr.mxu0 0.0
    %870 = vmatpush1.msra.mxu0 0.0
    %871 = vmatprep.subr.mxu0 0.0
    %872 = vmatpush1.msra.mxu0 0.0
    %873 = vmatprep.subr.mxu0 0.0
    %874 = vmatpush1.msra.mxu0 0.0
    %875 = vmatprep.subr.mxu0 0.0
    %876 = vmatpush1.msra.mxu0 0.0
    %877 = vmatprep.subr.mxu0 0.0
    %878 = vmatpush1.msra.mxu0 0.0
    %879 = vmatprep.subr.mxu0 0.0
    %880 = vmatpush1.msra.mxu0 0.0
    %881 = vmatprep.subr.mxu0 0.0
    %882 = vmatpush1.msra.mxu0 0.0
    %883 = vmatprep.subr.mxu0 0.0
    %884 = vmatpush1.msra.mxu0 0.0
    %885 = vmatprep.subr.mxu0 0.0
    %886 = vmatpush1.msra.mxu0 0.0
    %887 = vmatprep.subr.mxu0 0.0
    %888 = vmatpush1.msra.mxu0 0.0
    %889 = vmatprep.subr.mxu0 0.0
    %890 = vmatpush1.msra.mxu0 0.0
    %891 = vmatprep.subr.mxu0 0.0
    %892 = vmatpush1.msra.mxu0 0.0
    %893 = vmatprep.subr.mxu0 0.0
    %894 = vmatpush1.msra.mxu0 0.0
    %895 = vmatprep.mubr.f32.mxu0 0.0
    %896 = vmatmul.mubr.f32.gmra.mrb[0].mxu0 %v288
    %v897 = vpop.f32.mrb[0].mxu0
    %v898 = vadd.f32 %v79, %v897
    %v899 = vpop.f32.mrb[0].mxu0
    %900 = vmatprep.mubr.f32.mxu0 0.0
    %901 = vmatmul.mubr.f32.gmra.mrb[0].mxu0 %v291
    %v902 = vpop.f32.mrb[0].mxu0
    %v903 = vadd.f32 %v84, %v902
    %v904 = vpop.f32.mrb[0].mxu0
    %905 = vdwg.mxu0
    %v906 = vmul.f32 %v898, 0.5
    %v907 = vmul.f32 %v903, 0.5
    %v908 = vtanh.pop %v906
    %v909 = vtanh.pop %v907
    %v910 = vmul.f32 %v908, 0.5
    %v911 = vmul.f32 %v909, 0.5
    %v912 = vadd.f32 %v910, 0.5
    %v913 = vadd.f32 %v911, 0.5
    %v914 = vmul.f32 %v379, %v912
    %v915 = vmul.f32 %v384, %v913
    %v916 = vadd.f32 %v914, %v915
    %v917 = vrot.slane %v916, 4
    %v918 = vadd.f32 %v916, %v917
    %v919 = vrot.slane %v918, 2
    %v920 = vadd.f32 %v918, %v919
    %v921 = vrot.slane %v920, 1
    %v922 = vadd.f32 %v920, %v921
    %v923 = vadd.f32 %v922, %v395
    %s924 = scalar_lea.vmem [#allocation3], 2
    %925 = vst [vmem:[%s924] sm:$0x1] %v923
    %s926 = scalar_lea.vmem %s1, 24
    %v927 = vld [vmem:[%s926] sm:$0x7f]
    %v928 = vmul.f32 %v92, %v923
    %v929 = vmul.f32 %v97, %v923
    %v931 = vsel %vm114, %v927, 0
    %933 = vmatprep.subr.mxu0 0.0
    %934 = vmatpush1.msra.mxu0 %v931
    %935 = vmatprep.subr.mxu0 0.0
    %936 = vmatpush1.msra.mxu0 0.0
    %937 = vmatprep.subr.mxu0 0.0
    %938 = vmatpush1.msra.mxu0 0.0
    %939 = vmatprep.subr.mxu0 0.0
    %940 = vmatpush1.msra.mxu0 0.0
    %941 = vmatprep.subr.mxu0 0.0
    %942 = vmatpush1.msra.mxu0 0.0
    %943 = vmatprep.subr.mxu0 0.0
    %944 = vmatpush1.msra.mxu0 0.0
    %945 = vmatprep.subr.mxu0 0.0
    %946 = vmatpush1.msra.mxu0 0.0
    %947 = vmatprep.subr.mxu0 0.0
    %948 = vmatpush1.msra.mxu0 0.0
    %949 = vmatprep.subr.mxu0 0.0
    %950 = vmatpush1.msra.mxu0 0.0
    %951 = vmatprep.subr.mxu0 0.0
    %952 = vmatpush1.msra.mxu0 0.0
    %953 = vmatprep.subr.mxu0 0.0
    %954 = vmatpush1.msra.mxu0 0.0
    %955 = vmatprep.subr.mxu0 0.0
    %956 = vmatpush1.msra.mxu0 0.0
    %957 = vmatprep.subr.mxu0 0.0
    %958 = vmatpush1.msra.mxu0 0.0
    %959 = vmatprep.subr.mxu0 0.0
    %960 = vmatpush1.msra.mxu0 0.0
    %961 = vmatprep.subr.mxu0 0.0
    %962 = vmatpush1.msra.mxu0 0.0
    %963 = vmatprep.subr.mxu0 0.0
    %964 = vmatpush1.msra.mxu0 0.0
    %965 = vmatprep.subr.mxu0 0.0
    %966 = vmatpush1.msra.mxu0 0.0
    %967 = vmatprep.subr.mxu0 0.0
    %968 = vmatpush1.msra.mxu0 0.0
    %969 = vmatprep.subr.mxu0 0.0
    %970 = vmatpush1.msra.mxu0 0.0
    %971 = vmatprep.subr.mxu0 0.0
    %972 = vmatpush1.msra.mxu0 0.0
    %973 = vmatprep.subr.mxu0 0.0
    %974 = vmatpush1.msra.mxu0 0.0
    %975 = vmatprep.subr.mxu0 0.0
    %976 = vmatpush1.msra.mxu0 0.0
    %977 = vmatprep.subr.mxu0 0.0
    %978 = vmatpush1.msra.mxu0 0.0
    %979 = vmatprep.subr.mxu0 0.0
    %980 = vmatpush1.msra.mxu0 0.0
    %981 = vmatprep.subr.mxu0 0.0
    %982 = vmatpush1.msra.mxu0 0.0
    %983 = vmatprep.subr.mxu0 0.0
    %984 = vmatpush1.msra.mxu0 0.0
    %985 = vmatprep.subr.mxu0 0.0
    %986 = vmatpush1.msra.mxu0 0.0
    %987 = vmatprep.subr.mxu0 0.0
    %988 = vmatpush1.msra.mxu0 0.0
    %989 = vmatprep.subr.mxu0 0.0
    %990 = vmatpush1.msra.mxu0 0.0
    %991 = vmatprep.subr.mxu0 0.0
    %992 = vmatpush1.msra.mxu0 0.0
    %993 = vmatprep.subr.mxu0 0.0
    %994 = vmatpush1.msra.mxu0 0.0
    %995 = vmatprep.subr.mxu0 0.0
    %996 = vmatpush1.msra.mxu0 0.0
    %997 = vmatprep.mubr.f32.mxu0 0.0
    %998 = vmatmul.mubr.f32.gmra.mrb[0].mxu0 %v109
    %v999 = vpop.f32.mrb[0].mxu0
    %v1000 = vadd.f32 0.0, %v999
    %v1001 = vpop.f32.mrb[0].mxu0
    %1002 = vmatprep.mubr.f32.mxu0 0.0
    %1003 = vmatmul.mubr.f32.gmra.mrb[0].mxu0 %v112
    %v1004 = vpop.f32.mrb[0].mxu0
    %v1005 = vadd.f32 0.0, %v1004
    %v1006 = vpop.f32.mrb[0].mxu0
    %1007 = vdwg.mxu0
    %v1008 = vadd.f32 %v928, %v1000
    %v1009 = vadd.f32 %v929, %v1005
    %v1010 = vadd.f32 %v1008, %v55
    %v1011 = vadd.f32 %v1009, %v60
    %1012 = vmatprep.subr.mxu0 0.0
    %1013 = vmatpush1.msra.mxu0 %v1010
    %1014 = vmatprep.subr.mxu0 0.0
    %1015 = vmatpush1.msra.mxu0 %v1011
    %1016 = vmatprep.subr.mxu0 0.0
    %1017 = vmatpush1.msra.mxu0 0.0
    %1018 = vmatprep.subr.mxu0 0.0
    %1019 = vmatpush1.msra.mxu0 0.0
    %1020 = vmatprep.subr.mxu0 0.0
    %1021 = vmatpush1.msra.mxu0 0.0
    %1022 = vmatprep.subr.mxu0 0.0
    %1023 = vmatpush1.msra.mxu0 0.0
    %1024 = vmatprep.subr.mxu0 0.0
    %1025 = vmatpush1.msra.mxu0 0.0
    %1026 = vmatprep.subr.mxu0 0.0
    %1027 = vmatpush1.msra.mxu0 0.0
    %1028 = vmatprep.subr.mxu0 0.0
    %1029 = vmatpush1.msra.mxu0 0.0
    %1030 = vmatprep.subr.mxu0 0.0
    %1031 = vmatpush1.msra.mxu0 0.0
    %1032 = vmatprep.subr.mxu0 0.0
    %1033 = vmatpush1.msra.mxu0 0.0
    %1034 = vmatprep.subr.mxu0 0.0
    %1035 = vmatpush1.msra.mxu0 0.0
    %1036 = vmatprep.subr.mxu0 0.0
    %1037 = vmatpush1.msra.mxu0 0.0
    %1038 = vmatprep.subr.mxu0 0.0
    %1039 = vmatpush1.msra.mxu0 0.0
    %1040 = vmatprep.subr.mxu0 0.0
    %1041 = vmatpush1.msra.mxu0 0.0
    %1042 = vmatprep.subr.mxu0 0.0
    %1043 = vmatpush1.msra.mxu0 0.0
    %1044 = vmatprep.subr.mxu0 0.0
    %1045 = vmatpush1.msra.mxu0 0.0
    %1046 = vmatprep.subr.mxu0 0.0
    %1047 = vmatpush1.msra.mxu0 0.0
    %1048 = vmatprep.subr.mxu0 0.0
    %1049 = vmatpush1.msra.mxu0 0.0
    %1050 = vmatprep.subr.mxu0 0.0
    %1051 = vmatpush1.msra.mxu0 0.0
    %1052 = vmatprep.subr.mxu0 0.0
    %1053 = vmatpush1.msra.mxu0 0.0
    %1054 = vmatprep.subr.mxu0 0.0
    %1055 = vmatpush1.msra.mxu0 0.0
    %1056 = vmatprep.subr.mxu0 0.0
    %1057 = vmatpush1.msra.mxu0 0.0
    %1058 = vmatprep.subr.mxu0 0.0
    %1059 = vmatpush1.msra.mxu0 0.0
    %1060 = vmatprep.subr.mxu0 0.0
    %1061 = vmatpush1.msra.mxu0 0.0
    %1062 = vmatprep.subr.mxu0 0.0
    %1063 = vmatpush1.msra.mxu0 0.0
    %1064 = vmatprep.subr.mxu0 0.0
    %1065 = vmatpush1.msra.mxu0 0.0
    %1066 = vmatprep.subr.mxu0 0.0
    %1067 = vmatpush1.msra.mxu0 0.0
    %1068 = vmatprep.subr.mxu0 0.0
    %1069 = vmatpush1.msra.mxu0 0.0
    %1070 = vmatprep.subr.mxu0 0.0
    %1071 = vmatpush1.msra.mxu0 0.0
    %1072 = vmatprep.subr.mxu0 0.0
    %1073 = vmatpush1.msra.mxu0 0.0
    %1074 = vmatprep.subr.mxu0 0.0
    %1075 = vmatpush1.msra.mxu0 0.0
    %1076 = vmatprep.mubr.f32.mxu0 0.0
    %1077 = vmatmul.mubr.f32.gmra.mrb[0].mxu0 %v199
    %v1078 = vpop.f32.mrb[0].mxu0
    %v1079 = vadd.f32 %v67, %v1078
    %v1080 = vpop.f32.mrb[0].mxu0
    %1081 = vmatprep.mubr.f32.mxu0 0.0
    %1082 = vmatmul.mubr.f32.gmra.mrb[0].mxu0 %v202
    %v1083 = vpop.f32.mrb[0].mxu0
    %v1084 = vadd.f32 %v72, %v1083
    %v1085 = vpop.f32.mrb[0].mxu0
    %1086 = vdwg.mxu0
    %v1087 = vmul.f32 %v1079, 0.5
    %v1088 = vmul.f32 %v1084, 0.5
    %v1089 = vtanh.pop %v1087
    %v1090 = vtanh.pop %v1088
    %v1091 = vmul.f32 %v1089, 0.5
    %v1092 = vmul.f32 %v1090, 0.5
    %v1093 = vadd.f32 %v1091, 0.5
    %v1094 = vadd.f32 %v1092, 0.5
    %1095 = vmatprep.subr.mxu0 0.0
    %1096 = vmatpush1.msra.mxu0 %v1093
    %1097 = vmatprep.subr.mxu0 0.0
    %1098 = vmatpush1.msra.mxu0 %v1094
    %1099 = vmatprep.subr.mxu0 0.0
    %1100 = vmatpush1.msra.mxu0 0.0
    %1101 = vmatprep.subr.mxu0 0.0
    %1102 = vmatpush1.msra.mxu0 0.0
    %1103 = vmatprep.subr.mxu0 0.0
    %1104 = vmatpush1.msra.mxu0 0.0
    %1105 = vmatprep.subr.mxu0 0.0
    %1106 = vmatpush1.msra.mxu0 0.0
    %1107 = vmatprep.subr.mxu0 0.0
    %1108 = vmatpush1.msra.mxu0 0.0
    %1109 = vmatprep.subr.mxu0 0.0
    %1110 = vmatpush1.msra.mxu0 0.0
    %1111 = vmatprep.subr.mxu0 0.0
    %1112 = vmatpush1.msra.mxu0 0.0
    %1113 = vmatprep.subr.mxu0 0.0
    %1114 = vmatpush1.msra.mxu0 0.0
    %1115 = vmatprep.subr.mxu0 0.0
    %1116 = vmatpush1.msra.mxu0 0.0
    %1117 = vmatprep.subr.mxu0 0.0
    %1118 = vmatpush1.msra.mxu0 0.0
    %1119 = vmatprep.subr.mxu0 0.0
    %1120 = vmatpush1.msra.mxu0 0.0
    %1121 = vmatprep.subr.mxu0 0.0
    %1122 = vmatpush1.msra.mxu0 0.0
    %1123 = vmatprep.subr.mxu0 0.0
    %1124 = vmatpush1.msra.mxu0 0.0
    %1125 = vmatprep.subr.mxu0 0.0
    %1126 = vmatpush1.msra.mxu0 0.0
    %1127 = vmatprep.subr.mxu0 0.0
    %1128 = vmatpush1.msra.mxu0 0.0
    %1129 = vmatprep.subr.mxu0 0.0
    %1130 = vmatpush1.msra.mxu0 0.0
    %1131 = vmatprep.subr.mxu0 0.0
    %1132 = vmatpush1.msra.mxu0 0.0
    %1133 = vmatprep.subr.mxu0 0.0
    %1134 = vmatpush1.msra.mxu0 0.0
    %1135 = vmatprep.subr.mxu0 0.0
    %1136 = vmatpush1.msra.mxu0 0.0
    %1137 = vmatprep.subr.mxu0 0.0
    %1138 = vmatpush1.msra.mxu0 0.0
    %1139 = vmatprep.subr.mxu0 0.0
    %1140 = vmatpush1.msra.mxu0 0.0
    %1141 = vmatprep.subr.mxu0 0.0
    %1142 = vmatpush1.msra.mxu0 0.0
    %1143 = vmatprep.subr.mxu0 0.0
    %1144 = vmatpush1.msra.mxu0 0.0
    %1145 = vmatprep.subr.mxu0 0.0
    %1146 = vmatpush1.msra.mxu0 0.0
    %1147 = vmatprep.subr.mxu0 0.0
    %1148 = vmatpush1.msra.mxu0 0.0
    %1149 = vmatprep.subr.mxu0 0.0
    %1150 = vmatpush1.msra.mxu0 0.0
    %1151 = vmatprep.subr.mxu0 0.0
    %1152 = vmatpush1.msra.mxu0 0.0
    %1153 = vmatprep.subr.mxu0 0.0
    %1154 = vmatpush1.msra.mxu0 0.0
    %1155 = vmatprep.subr.mxu0 0.0
    %1156 = vmatpush1.msra.mxu0 0.0
    %1157 = vmatprep.subr.mxu0 0.0
    %1158 = vmatpush1.msra.mxu0 0.0
    %1159 = vmatprep.mubr.f32.mxu0 0.0
    %1160 = vmatmul.mubr.f32.gmra.mrb[0].mxu0 %v288
    %v1161 = vpop.f32.mrb[0].mxu0
    %v1162 = vadd.f32 %v79, %v1161
    %v1163 = vpop.f32.mrb[0].mxu0
    %1164 = vmatprep.mubr.f32.mxu0 0.0
    %1165 = vmatmul.mubr.f32.gmra.mrb[0].mxu0 %v291
    %v1166 = vpop.f32.mrb[0].mxu0
    %v1167 = vadd.f32 %v84, %v1166
    %v1168 = vpop.f32.mrb[0].mxu0
    %1169 = vdwg.mxu0
    %v1170 = vmul.f32 %v1162, 0.5
    %v1171 = vmul.f32 %v1167, 0.5
    %v1172 = vtanh.pop %v1170
    %v1173 = vtanh.pop %v1171
    %v1174 = vmul.f32 %v1172, 0.5
    %v1175 = vmul.f32 %v1173, 0.5
    %v1176 = vadd.f32 %v1174, 0.5
    %v1177 = vadd.f32 %v1175, 0.5
    %v1178 = vmul.f32 %v379, %v1176
    %v1179 = vmul.f32 %v384, %v1177
    %v1180 = vadd.f32 %v1178, %v1179
    %v1181 = vrot.slane %v1180, 4
    %v1182 = vadd.f32 %v1180, %v1181
    %v1183 = vrot.slane %v1182, 2
    %v1184 = vadd.f32 %v1182, %v1183
    %v1185 = vrot.slane %v1184, 1
    %v1186 = vadd.f32 %v1184, %v1185
    %v1187 = vadd.f32 %v1186, %v395
    %s1188 = scalar_lea.vmem [#allocation3], 3
    %1189 = vst [vmem:[%s1188] sm:$0x1] %v1187
    // Predicated region
    $region46: #{tpu_custom_call.1} parent=1 // pred_check
      _
    $region47: #{tpu_custom_call.1} parent=1 // pred_check_branch
      %1191 = sbr.rel (0) target = $region49
    $region48: #{tpu_custom_call.1} parent=1 // pred_region
      %s1193 = ssub.s32 64, 64
      %1194 = vsyncadd [#allocation4], %s1193
      %s1195 = sshll.u32 [#allocation3], 4
      %s1196 = int_to_ptr.vmem [resolvable:$true] %s1195
      %1201 = dma.vmem_to_hbm [thread:$0]  %s1196, 64, %s11, [#allocation4], 16, 16, 1
    $region49: #{tpu_custom_call.1} parent=1 // pred_fallthru
      _
    // Predicated region
    $region50: #{tpu_custom_call.1} parent=1 // pred_check
      _
    $region51: #{tpu_custom_call.1} parent=1 // pred_check_branch
      %1203 = sbr.rel (0) target = $region53
    $region52: #{tpu_custom_call.1} parent=1 // pred_region
      %1204 = dma.done [#allocation4], 64
    $region53: #{tpu_custom_call.1} parent=1 // pred_fallthru
      _
    %1205 = vsyncpa [#allocation4], 1

</llo_original>
